<compile_context>
chip_gen: v7x
topology: tpu7x:2x2x1
jax: 0.10.0
libtpu: 0.0.40
codegen_flags: <defaults>
</compile_context>

<pallas_src>
import jax
import jax.numpy as jnp
from jax.experimental import pallas as pl
from jax.experimental.pallas import tpu as pltpu

BN_EPS = 1e-5


def _pick_row_tile(h, lane_w):
    """Largest multiple-of-8 divisor of H whose f32 accumulator (row_tile x
    lane_w) stays under ~128 KiB.  Falls back to the whole image (block ==
    full dim is always legal) when H has no suitable divisor."""
    max_rows = min(256, max(8, (128 * 1024) // (4 * lane_w)))
    max_rows = (max_rows // 8) * 8
    for cand in range(max_rows, 7, -8):
        if h % cand == 0:
            return cand
    return h


def _vmem_limit_bytes(hp, wpcin, kh, lane_w, row_tile):
    dbl = 2  # BlockSpec double-buffering
    est = 4 * (dbl * hp * wpcin              # resident padded-image block
               + dbl * kh * wpcin * lane_w   # banded weights
               + dbl * lane_w * lane_w       # channel-projection matrix P
               + dbl * row_tile * lane_w     # output tile
               + 6 * 8 * lane_w)             # packed aux + stats + scratch
    est = 2 * est + (2 << 20)                # 2x headroom + 2 MiB slack
    try:
        phys = pltpu.get_tpu_info().vmem_capacity_bytes
    except Exception:
        phys = 64 << 20                      # conservative: assume v7x VMEM
    cap = (phys * 9) // 16                   # ~36 MiB (v7x) / ~72 MiB (v5e/v6e)
    return int(min(cap, max(4 << 20, est)))


def _banded_weight(w, W, Wp):
    """A[ky, p*Cin+ci, w*Cout+co] = w[co, ci, ky, p-w] for 0 <= p-w < KW.
    Built with O(W) scatter updates of the per-tap (Cin, Cout) blocks (no dense
    O(W^2) shift-tensor einsum)."""
    Cout, Cin, KH, KW = w.shape
    wt = jnp.transpose(w, (2, 3, 1, 0)).astype(jnp.float32)   # (KH, KW, Cin, Cout)
    A = jnp.zeros((KH, Wp, Cin, W, Cout), jnp.float32)
    w_idx = jnp.arange(W)
    for kx in range(KW):                                      # static 3-tap loop
        # Advanced indices (w_idx + kx, w_idx) select the kx-th band; advanced
        # axes move to the front, so wt[:, kx] broadcasts over the leading W.
        A = A.at[:, w_idx + kx, :, w_idx, :].set(wt[:, kx])
    return A.reshape(KH, Wp * Cin, W * Cout)


def _make_conv_relu(row_tile, kh, lane_w, aligned):
    """conv (implicit GEMM over the ky taps of the banded weight) + bias + ReLU
    for the current row tile.  x_ref: (Hp, Wp*Cin), a_ref: (KH, Wp*Cin, W*Cout),
    vec_ref: (8, W*Cout) with the conv bias in row 0.  Returns (row_tile,
    W*Cout) f32."""
    def conv_relu(x_ref, a_ref, vec_ref):
        row0 = pl.program_id(1) * row_tile
        if aligned:
            row0 = pl.multiple_of(row0, 8)      # sublane-aligned tile base
        acc = jnp.zeros((row_tile, lane_w), jnp.float32)
        for ky in range(kh):                    # static unroll (3 taps)
            lhs = x_ref[pl.ds(row0 + ky, row_tile), :]
            acc = acc + jnp.dot(lhs, a_ref[ky],
                                preferred_element_type=jnp.float32)
        acc = acc + vec_ref[pl.ds(0, 1), :]     # conv bias row
        return jnp.maximum(acc, 0.0)
    return conv_relu


def dae_encoder_block(x_nchw, w, b, gamma, beta, *, stride=1, padding=1):
    """Forward pass of DAEEncoderBlock (conv -> ReLU -> BN, training stats)."""
    N, Cin, H, W = x_nchw.shape
    Cout, Cin2, KH, KW = w.shape
    assert Cin2 == Cin
    assert stride == 1 and KH == KW and 2 * padding == KH - 1, "module defaults"

    # --- wrapper glue: NHWC view + 1px spatial pad (single small pass) ---
    # TODO(synk): fold the NCHW->NHWC transpose + pad into the kernel load path
    #             (masked halo taps) to remove this last extra copy of x.
    x = jnp.transpose(x_nchw, (0, 2, 3, 1)).astype(jnp.float32)        # (N,H,W,Cin)
    xp = jnp.pad(x, ((0, 0), (padding, padding), (padding, padding), (0, 0)))
    Hp, Wp = H + 2 * padding, W + 2 * padding
    xr = xp.reshape(N, Hp, Wp * Cin)                                   # lane dim Wp*Cin

    lane_w = W * Cout                                                  # output lane width
    A = _banded_weight(w, W, Wp)                                       # (KH, Wp*Cin, lane_w)

    # Packed aux rows (lane layout w*Cout + co, matching the conv output):
    # row 0 = conv bias, row 1 = gamma, row 2 = beta, rows 3..7 zero padding.
    def lane_tile(v):
        return jnp.tile(v.astype(jnp.float32), W)
    vecs = jnp.zeros((8, lane_w), jnp.float32)
    vecs = vecs.at[0].set(lane_tile(b))
    vecs = vecs.at[1].set(lane_tile(gamma))
    vecs = vecs.at[2].set(lane_tile(beta))

    # Channel projection: P[i, j] = (i % Cout == j % Cout).  stats_row @ P sums
    # each channel over the W lane groups and replicates the total back to
    # every w, keeping the whole BN reduction lane-aligned and in-kernel.
    lane_ch = jnp.arange(lane_w) % Cout
    P = (lane_ch[:, None] == lane_ch[None, :]).astype(jnp.float32)

    row_tile = _pick_row_tile(H, lane_w)
    aligned = (row_tile % 8 == 0)
    T = H // row_tile
    grid = (N, T)
    conv_relu = _make_conv_relu(row_tile, KH, lane_w, aligned)
    inv_count = 1.0 / float(N * H * W)
    vmem_bytes = _vmem_limit_bytes(Hp, Wp * Cin, KH, lane_w, row_tile)

    x_spec = pl.BlockSpec((None, Hp, Wp * Cin), lambda n, t: (n, 0, 0))
    a_spec = pl.BlockSpec((KH, Wp * Cin, lane_w), lambda n, t: (0, 0, 0))
    row8_spec = pl.BlockSpec((8, lane_w), lambda n, t: (0, 0))
    p_spec = pl.BlockSpec((lane_w, lane_w), lambda n, t: (0, 0))

    # ------- pass 1: conv + ReLU, BN sum / sumsq accumulated fully in-kernel -------
    def stats_kernel(x_ref, a_ref, vec_ref, p_ref, stats_ref, acc_ref):
        n, t = pl.program_id(0), pl.program_id(1)

        @pl.when(jnp.logical_and(n == 0, t == 0))
        def _():
            acc_ref[...] = jnp.zeros_like(acc_ref)

        y = conv_relu(x_ref, a_ref, vec_ref)
        s0 = acc_ref[pl.ds(0, 1), :]
        acc_ref[pl.ds(0, 1), :] = s0 + jnp.sum(y, axis=0, keepdims=True)
        s1 = acc_ref[pl.ds(1, 1), :]
        acc_ref[pl.ds(1, 1), :] = s1 + jnp.sum(y * y, axis=0, keepdims=True)

        @pl.when(jnp.logical_and(n == pl.num_programs(0) - 1,
                                 t == pl.num_programs(1) - 1))
        def _():
            # Per-channel totals, replicated over the W lane groups; one dense
            # (8, lane_w) store at the very end of the grid.
            stats_ref[...] = jnp.dot(acc_ref[...], p_ref[...],
                                     preferred_element_type=jnp.float32)

    stats = pl.pallas_call(
        stats_kernel,
        out_shape=jax.ShapeDtypeStruct((8, lane_w), jnp.float32),
        grid=grid,
        in_specs=[x_spec, a_spec, row8_spec, p_spec],
        out_specs=pl.BlockSpec((8, lane_w), lambda n, t: (0, 0)),
        scratch_shapes=[pltpu.VMEM((8, lane_w), jnp.float32)],
        compiler_params=pltpu.CompilerParams(
            dimension_semantics=("arbitrary", "arbitrary"),
            vmem_limit_bytes=vmem_bytes),
    )(xr, A, vecs, P)

    # ------- pass 2: recompute conv + ReLU, fold BN scale/shift in-kernel -------
    # (Recompute is cheaper than writing + re-reading an HBM intermediate that
    #  is larger than the input when Cout > Cin.)
    def out_kernel(x_ref, a_ref, vec_ref, stats_ref, o_ref):
        y = conv_relu(x_ref, a_ref, vec_ref)
        ch_sum = stats_ref[pl.ds(0, 1), :]
        ch_sq = stats_ref[pl.ds(1, 1), :]
        mean = ch_sum * inv_count
        # TODO(synk): E[x^2]-mean^2 can cancel at very large counts; switch to a
        #             two-pass / Welford-style variance for production scale.
        var = jnp.maximum(ch_sq * inv_count - mean * mean, 0.0)
        inv_std = jax.lax.rsqrt(var + BN_EPS)
        scale = vec_ref[pl.ds(1, 1), :] * inv_std            # gamma * inv_std
        shift = vec_ref[pl.ds(2, 1), :] - mean * scale       # beta - mean*scale
        o_ref[...] = (y * scale + shift).astype(o_ref.dtype)

    out3 = pl.pallas_call(
        out_kernel,
        out_shape=jax.ShapeDtypeStruct((N, H, lane_w), x_nchw.dtype),
        grid=grid,
        in_specs=[x_spec, a_spec, row8_spec, row8_spec],
        out_specs=pl.BlockSpec((None, row_tile, lane_w), lambda n, t: (n, t, 0)),
        compiler_params=pltpu.CompilerParams(
            dimension_semantics=("parallel", "parallel"),
            vmem_limit_bytes=vmem_bytes),
    )(xr, A, vecs, stats)

    return out3.reshape(N, H, W, Cout).transpose(0, 3, 1, 2)           # NCHW


def reference_forward(x, w, b, gamma, beta):
    """Pure-JAX reference matching PyTorch training-mode forward."""
    y = jax.lax.conv_general_dilated(
        x, w, window_strides=(1, 1), padding=((1, 1), (1, 1)),
        dimension_numbers=("NCHW", "OIHW", "NCHW"))
    y = y + b.reshape(1, -1, 1, 1)
    y = jnp.maximum(y, 0.0)
    mean = jnp.mean(y, axis=(0, 2, 3), keepdims=True)
    var = jnp.mean((y - mean) ** 2, axis=(0, 2, 3), keepdims=True)
    return ((y - mean) * jax.lax.rsqrt(var + BN_EPS)
            * gamma.reshape(1, -1, 1, 1) + beta.reshape(1, -1, 1, 1))


if __name__ == "__main__":
    # Small shapes consistent with the module: batch=2, in_channels=4,
    # out_channels=8, spatial=16x16 (so W*Cout = 128 lanes, fully dense).
    N, Cin, Cout, H, W = 2, 4, 8, 16, 16
    key = jax.random.PRNGKey(0)
    kx, kw, kb, kg, kbe = jax.random.split(key, 5)

    x = jax.random.normal(kx, (N, Cin, H, W), dtype=jnp.float32)
    fan_in = Cin * 3 * 3
    w = jax.random.normal(kw, (Cout, Cin, 3, 3), dtype=jnp.float32) * (1.0 / fan_in ** 0.5)
    b = jax.random.normal(kb, (Cout,), dtype=jnp.float32) * 0.1
    gamma = 1.0 + 0.1 * jax.random.normal(kg, (Cout,), dtype=jnp.float32)
    beta = 0.1 * jax.random.normal(kbe, (Cout,), dtype=jnp.float32)

    fwd = jax.jit(lambda xx, ww, bb, gg, be: dae_encoder_block(xx, ww, bb, gg, be))
    out = jax.block_until_ready(fwd(x, w, b, gamma, beta))
    ref = jax.block_until_ready(reference_forward(x, w, b, gamma, beta))

    assert out.shape == (N, Cout, H, W), out.shape
    assert jnp.allclose(out, ref, atol=1e-3, rtol=1e-3), float(jnp.max(jnp.abs(out - ref)))
    print("KERNEL_OK")
</pallas_src>

<mosaic_0001>
module attributes {stable_mosaic.version = 11 : i64} {
  func.func @out_kernel(%arg0: i32, %arg1: i32, %arg2: memref<1x18x72xf32, #tpu.memory_space<vmem>>, %arg3: memref<3x72x128xf32, #tpu.memory_space<vmem>>, %arg4: memref<8x128xf32, #tpu.memory_space<vmem>>, %arg5: memref<8x128xf32, #tpu.memory_space<vmem>>, %arg6: memref<1x16x128xf32, #tpu.memory_space<vmem>>) attributes {dimension_semantics = [#tpu.dimension_semantics<parallel>, #tpu.dimension_semantics<parallel>], iteration_bounds = array<i64: 2, 1>, scalar_prefetch = 0 : i64, scratch_operands = 0 : i64, tpu.core_type = #tpu.core_type<tc>, window_params = [{transform_indices = @transform_0, window_bounds = array<i64: 1, 18, 72>}, {pipeline_mode = #tpu.pipeline_mode<synchronous>, transform_indices = @transform_1, window_bounds = array<i64: 3, 72, 128>}, {pipeline_mode = #tpu.pipeline_mode<synchronous>, transform_indices = @transform_2, window_bounds = array<i64: 8, 128>}, {pipeline_mode = #tpu.pipeline_mode<synchronous>, transform_indices = @transform_3, window_bounds = array<i64: 8, 128>}, {transform_indices = @transform_4, window_bounds = array<i64: 1, 16, 128>}]} {
    %c16_i32 = arith.constant 16 : i32
    %0 = arith.muli %arg1, %c16_i32 : i32
    %1 = tpu.assume_multiple %0, 8 : i32
    %cst = arith.constant 0.000000e+00 : f32
    %2 = vector.broadcast %cst : f32 to vector<16x128xf32>
    %c0_i32 = arith.constant 0 : i32
    %3 = arith.addi %1, %c0_i32 : i32
    %c0 = arith.constant 0 : index
    %4 = arith.index_cast %3 : i32 to index
    %c0_0 = arith.constant 0 : index
    %5 = vector.load %arg2[%c0, %4, %c0_0] : memref<1x18x72xf32, #tpu.memory_space<vmem>>, vector<1x16x72xf32>
    %6 = vector.shape_cast %5 : vector<1x16x72xf32> to vector<16x72xf32>
    %c0_1 = arith.constant 0 : index
    %c0_2 = arith.constant 0 : index
    %c0_3 = arith.constant 0 : index
    %7 = vector.load %arg3[%c0_1, %c0_2, %c0_3] : memref<3x72x128xf32, #tpu.memory_space<vmem>>, vector<1x72x128xf32>
    %8 = vector.shape_cast %7 : vector<1x72x128xf32> to vector<72x128xf32>
    %cst_4 = arith.constant dense<0.000000e+00> : vector<16x128xf32>
    %9 = tpu.matmul %6, %8, %cst_4 {dimension_numbers = #tpu.dot_dimension_numbers<[1], [0], [0], [1], [0, 0, 1, 1], [], []>} : vector<16x72xf32>, vector<72x128xf32>, vector<16x128xf32> -> vector<16x128xf32>
    %10 = arith.addf %2, %9 : vector<16x128xf32>
    %c1_i32 = arith.constant 1 : i32
    %11 = arith.addi %1, %c1_i32 : i32
    %c0_5 = arith.constant 0 : index
    %12 = arith.index_cast %11 : i32 to index
    %c0_6 = arith.constant 0 : index
    %13 = vector.load %arg2[%c0_5, %12, %c0_6] : memref<1x18x72xf32, #tpu.memory_space<vmem>>, vector<1x16x72xf32>
    %14 = vector.shape_cast %13 : vector<1x16x72xf32> to vector<16x72xf32>
    %c1 = arith.constant 1 : index
    %c0_7 = arith.constant 0 : index
    %c0_8 = arith.constant 0 : index
    %15 = vector.load %arg3[%c1, %c0_7, %c0_8] : memref<3x72x128xf32, #tpu.memory_space<vmem>>, vector<1x72x128xf32>
    %16 = vector.shape_cast %15 : vector<1x72x128xf32> to vector<72x128xf32>
    %cst_9 = arith.constant dense<0.000000e+00> : vector<16x128xf32>
    %17 = tpu.matmul %14, %16, %cst_9 {dimension_numbers = #tpu.dot_dimension_numbers<[1], [0], [0], [1], [0, 0, 1, 1], [], []>} : vector<16x72xf32>, vector<72x128xf32>, vector<16x128xf32> -> vector<16x128xf32>
    %18 = arith.addf %10, %17 : vector<16x128xf32>
    %c2_i32 = arith.constant 2 : i32
    %19 = arith.addi %1, %c2_i32 : i32
    %c0_10 = arith.constant 0 : index
    %20 = arith.index_cast %19 : i32 to index
    %c0_11 = arith.constant 0 : index
    %21 = vector.load %arg2[%c0_10, %20, %c0_11] : memref<1x18x72xf32, #tpu.memory_space<vmem>>, vector<1x16x72xf32>
    %22 = vector.shape_cast %21 : vector<1x16x72xf32> to vector<16x72xf32>
    %c2 = arith.constant 2 : index
    %c0_12 = arith.constant 0 : index
    %c0_13 = arith.constant 0 : index
    %23 = vector.load %arg3[%c2, %c0_12, %c0_13] : memref<3x72x128xf32, #tpu.memory_space<vmem>>, vector<1x72x128xf32>
    %24 = vector.shape_cast %23 : vector<1x72x128xf32> to vector<72x128xf32>
    %cst_14 = arith.constant dense<0.000000e+00> : vector<16x128xf32>
    %25 = tpu.matmul %22, %24, %cst_14 {dimension_numbers = #tpu.dot_dimension_numbers<[1], [0], [0], [1], [0, 0, 1, 1], [], []>} : vector<16x72xf32>, vector<72x128xf32>, vector<16x128xf32> -> vector<16x128xf32>
    %26 = arith.addf %18, %25 : vector<16x128xf32>
    %c0_15 = arith.constant 0 : index
    %c0_16 = arith.constant 0 : index
    %27 = vector.load %arg4[%c0_15, %c0_16] : memref<8x128xf32, #tpu.memory_space<vmem>>, vector<1x128xf32>
    %28 = vector.broadcast %27 : vector<1x128xf32> to vector<16x128xf32>
    %29 = arith.addf %26, %28 : vector<16x128xf32>
    %cst_17 = arith.constant 0.000000e+00 : f32
    %30 = vector.broadcast %cst_17 : f32 to vector<16x128xf32>
    %31 = arith.maximumf %29, %30 : vector<16x128xf32>
    %c0_18 = arith.constant 0 : index
    %c0_19 = arith.constant 0 : index
    %32 = vector.load %arg5[%c0_18, %c0_19] : memref<8x128xf32, #tpu.memory_space<vmem>>, vector<1x128xf32>
    %c1_20 = arith.constant 1 : index
    %c0_21 = arith.constant 0 : index
    %33 = vector.load %arg5[%c1_20, %c0_21] : memref<8x128xf32, #tpu.memory_space<vmem>>, vector<1x128xf32>
    %cst_22 = arith.constant 0.001953125 : f32
    %34 = vector.broadcast %cst_22 : f32 to vector<1x128xf32>
    %35 = arith.mulf %32, %34 : vector<1x128xf32>
    %cst_23 = arith.constant 0.001953125 : f32
    %36 = vector.broadcast %cst_23 : f32 to vector<1x128xf32>
    %37 = arith.mulf %33, %36 : vector<1x128xf32>
    %38 = arith.mulf %35, %35 : vector<1x128xf32>
    %39 = arith.subf %37, %38 : vector<1x128xf32>
    %cst_24 = arith.constant 0.000000e+00 : f32
    %40 = vector.broadcast %cst_24 : f32 to vector<1x128xf32>
    %41 = arith.maximumf %39, %40 : vector<1x128xf32>
    %cst_25 = arith.constant 9.99999974E-6 : f32
    %42 = vector.broadcast %cst_25 : f32 to vector<1x128xf32>
    %43 = arith.addf %41, %42 : vector<1x128xf32>
    %44 = math.rsqrt %43 : vector<1x128xf32>
    %c1_26 = arith.constant 1 : index
    %c0_27 = arith.constant 0 : index
    %45 = vector.load %arg4[%c1_26, %c0_27] : memref<8x128xf32, #tpu.memory_space<vmem>>, vector<1x128xf32>
    %46 = arith.mulf %45, %44 : vector<1x128xf32>
    %c2_28 = arith.constant 2 : index
    %c0_29 = arith.constant 0 : index
    %47 = vector.load %arg4[%c2_28, %c0_29] : memref<8x128xf32, #tpu.memory_space<vmem>>, vector<1x128xf32>
    %48 = arith.mulf %35, %46 : vector<1x128xf32>
    %49 = arith.subf %47, %48 : vector<1x128xf32>
    %50 = vector.broadcast %46 : vector<1x128xf32> to vector<16x128xf32>
    %51 = arith.mulf %31, %50 : vector<16x128xf32>
    %52 = vector.broadcast %49 : vector<1x128xf32> to vector<16x128xf32>
    %53 = arith.addf %51, %52 : vector<16x128xf32>
    %c0_30 = arith.constant 0 : index
    %c0_31 = arith.constant 0 : index
    %c0_32 = arith.constant 0 : index
    %54 = vector.load %arg6[%c0_30, %c0_31, %c0_32] : memref<1x16x128xf32, #tpu.memory_space<vmem>>, vector<1x16x128xf32>
    %55 = vector.shape_cast %54 : vector<1x16x128xf32> to vector<16x128xf32>
    %56 = vector.shape_cast %53 : vector<16x128xf32> to vector<1x16x128xf32>
    tpu.vector_store %arg6[%c0_30, %c0_31, %c0_32], %56 {strides = array<i32>} : memref<1x16x128xf32, #tpu.memory_space<vmem>>, vector<1x16x128xf32>,
    return
  }
  func.func @transform_0(%arg0: i32, %arg1: i32) -> (i32, i32, i32) {
    %c0_i32 = arith.constant 0 : i32
    %c0_i32_0 = arith.constant 0 : i32
    %c0_i32_1 = arith.constant 0 : i32
    return %arg0, %c0_i32, %c0_i32_0 : i32, i32, i32
  }
  func.func @transform_1(%arg0: i32, %arg1: i32) -> (i32, i32, i32) {
    %c0_i32 = arith.constant 0 : i32
    %c0_i32_0 = arith.constant 0 : i32
    %c0_i32_1 = arith.constant 0 : i32
    %c0_i32_2 = arith.constant 0 : i32
    return %c0_i32, %c0_i32_0, %c0_i32_1 : i32, i32, i32
  }
  func.func @transform_2(%arg0: i32, %arg1: i32) -> (i32, i32) {
    %c0_i32 = arith.constant 0 : i32
    %c0_i32_0 = arith.constant 0 : i32
    %c0_i32_1 = arith.constant 0 : i32
    return %c0_i32, %c0_i32_0 : i32, i32
  }
  func.func @transform_3(%arg0: i32, %arg1: i32) -> (i32, i32) {
    %c0_i32 = arith.constant 0 : i32
    %c0_i32_0 = arith.constant 0 : i32
    %c0_i32_1 = arith.constant 0 : i32
    return %c0_i32, %c0_i32_0 : i32, i32
  }
  func.func @transform_4(%arg0: i32, %arg1: i32) -> (i32, i32, i32) {
    %c0_i32 = arith.constant 0 : i32
    %c0_i32_0 = arith.constant 0 : i32
    return %arg0, %arg1, %c0_i32 : i32, i32, i32
  }
}

module attributes {stable_mosaic.version = 11 : i64} {
  func.func @stats_kernel(%arg0: i32, %arg1: i32, %arg2: memref<1x18x72xf32, #tpu.memory_space<vmem>>, %arg3: memref<3x72x128xf32, #tpu.memory_space<vmem>>, %arg4: memref<8x128xf32, #tpu.memory_space<vmem>>, %arg5: memref<128x128xf32, #tpu.memory_space<vmem>>, %arg6: memref<8x128xf32, #tpu.memory_space<vmem>>, %arg7: memref<8x128xf32, #tpu.memory_space<vmem>>) attributes {dimension_semantics = [#tpu.dimension_semantics<arbitrary>, #tpu.dimension_semantics<arbitrary>], iteration_bounds = array<i64: 2, 1>, scalar_prefetch = 0 : i64, scratch_operands = 1 : i64, tpu.core_type = #tpu.core_type<tc>, window_params = [{transform_indices = @transform_0, window_bounds = array<i64: 1, 18, 72>}, {pipeline_mode = #tpu.pipeline_mode<synchronous>, transform_indices = @transform_1, window_bounds = array<i64: 3, 72, 128>}, {pipeline_mode = #tpu.pipeline_mode<synchronous>, transform_indices = @transform_2, window_bounds = array<i64: 8, 128>}, {pipeline_mode = #tpu.pipeline_mode<synchronous>, transform_indices = @transform_3, window_bounds = array<i64: 128, 128>}, {pipeline_mode = #tpu.pipeline_mode<synchronous>, transform_indices = @transform_4, window_bounds = array<i64: 8, 128>}]} {
    %c0_i32 = arith.constant 0 : i32
    %0 = arith.cmpi eq, %arg0, %c0_i32 : i32
    %c0_i32_0 = arith.constant 0 : i32
    %1 = arith.cmpi eq, %arg1, %c0_i32_0 : i32
    %2 = arith.andi %0, %1 : i1
    %3 = arith.extui %2 : i1 to i32
    %c0_i32_1 = arith.constant 0 : i32
    %4 = arith.cmpi ne, %3, %c0_i32_1 : i32
    scf.if %4 {
      %cst_34 = arith.constant 0.000000e+00 : f32
      %53 = vector.broadcast %cst_34 : f32 to vector<8x128xf32>
      %c0_35 = arith.constant 0 : index
      %c0_36 = arith.constant 0 : index
      %54 = vector.load %arg7[%c0_35, %c0_36] : memref<8x128xf32, #tpu.memory_space<vmem>>, vector<8x128xf32>
      tpu.vector_store %arg7[%c0_35, %c0_36], %53 {strides = array<i32>} : memref<8x128xf32, #tpu.memory_space<vmem>>, vector<8x128xf32>,
    } else {
    }
    %c16_i32 = arith.constant 16 : i32
    %5 = arith.muli %arg1, %c16_i32 : i32
    %6 = tpu.assume_multiple %5, 8 : i32
    %cst = arith.constant 0.000000e+00 : f32
    %7 = vector.broadcast %cst : f32 to vector<16x128xf32>
    %c0_i32_2 = arith.constant 0 : i32
    %8 = arith.addi %6, %c0_i32_2 : i32
    %c0 = arith.constant 0 : index
    %9 = arith.index_cast %8 : i32 to index
    %c0_3 = arith.constant 0 : index
    %10 = vector.load %arg2[%c0, %9, %c0_3] : memref<1x18x72xf32, #tpu.memory_space<vmem>>, vector<1x16x72xf32>
    %11 = vector.shape_cast %10 : vector<1x16x72xf32> to vector<16x72xf32>
    %c0_4 = arith.constant 0 : index
    %c0_5 = arith.constant 0 : index
    %c0_6 = arith.constant 0 : index
    %12 = vector.load %arg3[%c0_4, %c0_5, %c0_6] : memref<3x72x128xf32, #tpu.memory_space<vmem>>, vector<1x72x128xf32>
    %13 = vector.shape_cast %12 : vector<1x72x128xf32> to vector<72x128xf32>
    %cst_7 = arith.constant dense<0.000000e+00> : vector<16x128xf32>
    %14 = tpu.matmul %11, %13, %cst_7 {dimension_numbers = #tpu.dot_dimension_numbers<[1], [0], [0], [1], [0, 0, 1, 1], [], []>} : vector<16x72xf32>, vector<72x128xf32>, vector<16x128xf32> -> vector<16x128xf32>
    %15 = arith.addf %7, %14 : vector<16x128xf32>
    %c1_i32 = arith.constant 1 : i32
    %16 = arith.addi %6, %c1_i32 : i32
    %c0_8 = arith.constant 0 : index
    %17 = arith.index_cast %16 : i32 to index
    %c0_9 = arith.constant 0 : index
    %18 = vector.load %arg2[%c0_8, %17, %c0_9] : memref<1x18x72xf32, #tpu.memory_space<vmem>>, vector<1x16x72xf32>
    %19 = vector.shape_cast %18 : vector<1x16x72xf32> to vector<16x72xf32>
    %c1 = arith.constant 1 : index
    %c0_10 = arith.constant 0 : index
    %c0_11 = arith.constant 0 : index
    %20 = vector.load %arg3[%c1, %c0_10, %c0_11] : memref<3x72x128xf32, #tpu.memory_space<vmem>>, vector<1x72x128xf32>
    %21 = vector.shape_cast %20 : vector<1x72x128xf32> to vector<72x128xf32>
    %cst_12 = arith.constant dense<0.000000e+00> : vector<16x128xf32>
    %22 = tpu.matmul %19, %21, %cst_12 {dimension_numbers = #tpu.dot_dimension_numbers<[1], [0], [0], [1], [0, 0, 1, 1], [], []>} : vector<16x72xf32>, vector<72x128xf32>, vector<16x128xf32> -> vector<16x128xf32>
    %23 = arith.addf %15, %22 : vector<16x128xf32>
    %c2_i32 = arith.constant 2 : i32
    %24 = arith.addi %6, %c2_i32 : i32
    %c0_13 = arith.constant 0 : index
    %25 = arith.index_cast %24 : i32 to index
    %c0_14 = arith.constant 0 : index
    %26 = vector.load %arg2[%c0_13, %25, %c0_14] : memref<1x18x72xf32, #tpu.memory_space<vmem>>, vector<1x16x72xf32>
    %27 = vector.shape_cast %26 : vector<1x16x72xf32> to vector<16x72xf32>
    %c2 = arith.constant 2 : index
    %c0_15 = arith.constant 0 : index
    %c0_16 = arith.constant 0 : index
    %28 = vector.load %arg3[%c2, %c0_15, %c0_16] : memref<3x72x128xf32, #tpu.memory_space<vmem>>, vector<1x72x128xf32>
    %29 = vector.shape_cast %28 : vector<1x72x128xf32> to vector<72x128xf32>
    %cst_17 = arith.constant dense<0.000000e+00> : vector<16x128xf32>
    %30 = tpu.matmul %27, %29, %cst_17 {dimension_numbers = #tpu.dot_dimension_numbers<[1], [0], [0], [1], [0, 0, 1, 1], [], []>} : vector<16x72xf32>, vector<72x128xf32>, vector<16x128xf32> -> vector<16x128xf32>
    %31 = arith.addf %23, %30 : vector<16x128xf32>
    %c0_18 = arith.constant 0 : index
    %c0_19 = arith.constant 0 : index
    %32 = vector.load %arg4[%c0_18, %c0_19] : memref<8x128xf32, #tpu.memory_space<vmem>>, vector<1x128xf32>
    %33 = vector.broadcast %32 : vector<1x128xf32> to vector<16x128xf32>
    %34 = arith.addf %31, %33 : vector<16x128xf32>
    %cst_20 = arith.constant 0.000000e+00 : f32
    %35 = vector.broadcast %cst_20 : f32 to vector<16x128xf32>
    %36 = arith.maximumf %34, %35 : vector<16x128xf32>
    %c0_21 = arith.constant 0 : index
    %c0_22 = arith.constant 0 : index
    %37 = vector.load %arg7[%c0_21, %c0_22] : memref<8x128xf32, #tpu.memory_space<vmem>>, vector<1x128xf32>
    %cst_23 = arith.constant dense<0.000000e+00> : vector<128xf32>
    %38 = vector.multi_reduction <add>, %36, %cst_23 [0] : vector<16x128xf32> to vector<128xf32>
    %39 = vector.shape_cast %38 : vector<128xf32> to vector<1x128xf32>
    %40 = arith.addf %37, %39 : vector<1x128xf32>
    %c0_24 = arith.constant 0 : index
    %c0_25 = arith.constant 0 : index
    %41 = vector.load %arg7[%c0_24, %c0_25] : memref<8x128xf32, #tpu.memory_space<vmem>>, vector<1x128xf32>
    tpu.vector_store %arg7[%c0_24, %c0_25], %40 {strides = array<i32>} : memref<8x128xf32, #tpu.memory_space<vmem>>, vector<1x128xf32>,
    %c1_26 = arith.constant 1 : index
    %c0_27 = arith.constant 0 : index
    %42 = vector.load %arg7[%c1_26, %c0_27] : memref<8x128xf32, #tpu.memory_space<vmem>>, vector<1x128xf32>
    %43 = arith.mulf %36, %36 : vector<16x128xf32>
    %cst_28 = arith.constant dense<0.000000e+00> : vector<128xf32>
    %44 = vector.multi_reduction <add>, %43, %cst_28 [0] : vector<16x128xf32> to vector<128xf32>
    %45 = vector.shape_cast %44 : vector<128xf32> to vector<1x128xf32>
    %46 = arith.addf %42, %45 : vector<1x128xf32>
    %c1_29 = arith.constant 1 : index
    %c0_30 = arith.constant 0 : index
    %47 = vector.load %arg7[%c1_29, %c0_30] : memref<8x128xf32, #tpu.memory_space<vmem>>, vector<1x128xf32>
    tpu.vector_store %arg7[%c1_29, %c0_30], %46 {strides = array<i32>} : memref<8x128xf32, #tpu.memory_space<vmem>>, vector<1x128xf32>,
    %c1_i32_31 = arith.constant 1 : i32
    %48 = arith.cmpi eq, %arg0, %c1_i32_31 : i32
    %c0_i32_32 = arith.constant 0 : i32
    %49 = arith.cmpi eq, %arg1, %c0_i32_32 : i32
    %50 = arith.andi %48, %49 : i1
    %51 = arith.extui %50 : i1 to i32
    %c0_i32_33 = arith.constant 0 : i32
    %52 = arith.cmpi ne, %51, %c0_i32_33 : i32
    scf.if %52 {
      %c0_34 = arith.constant 0 : index
      %c0_35 = arith.constant 0 : index
      %53 = vector.load %arg7[%c0_34, %c0_35] : memref<8x128xf32, #tpu.memory_space<vmem>>, vector<8x128xf32>
      %c0_36 = arith.constant 0 : index
      %c0_37 = arith.constant 0 : index
      %54 = vector.load %arg5[%c0_36, %c0_37] : memref<128x128xf32, #tpu.memory_space<vmem>>, vector<128x128xf32>
      %cst_38 = arith.constant dense<0.000000e+00> : vector<8x128xf32>
      %55 = tpu.matmul %53, %54, %cst_38 {dimension_numbers = #tpu.dot_dimension_numbers<[1], [0], [0], [1], [0, 0, 1, 1], [], []>} : vector<8x128xf32>, vector<128x128xf32>, vector<8x128xf32> -> vector<8x128xf32>
      %c0_39 = arith.constant 0 : index
      %c0_40 = arith.constant 0 : index
      %56 = vector.load %arg6[%c0_39, %c0_40] : memref<8x128xf32, #tpu.memory_space<vmem>>, vector<8x128xf32>
      tpu.vector_store %arg6[%c0_39, %c0_40], %55 {strides = array<i32>} : memref<8x128xf32, #tpu.memory_space<vmem>>, vector<8x128xf32>,
    } else {
    }
    return
  }
  func.func @transform_0(%arg0: i32, %arg1: i32) -> (i32, i32, i32) {
    %c0_i32 = arith.constant 0 : i32
    %c0_i32_0 = arith.constant 0 : i32
    %c0_i32_1 = arith.constant 0 : i32
    return %arg0, %c0_i32, %c0_i32_0 : i32, i32, i32
  }
  func.func @transform_1(%arg0: i32, %arg1: i32) -> (i32, i32, i32) {
    %c0_i32 = arith.constant 0 : i32
    %c0_i32_0 = arith.constant 0 : i32
    %c0_i32_1 = arith.constant 0 : i32
    %c0_i32_2 = arith.constant 0 : i32
    return %c0_i32, %c0_i32_0, %c0_i32_1 : i32, i32, i32
  }
  func.func @transform_2(%arg0: i32, %arg1: i32) -> (i32, i32) {
    %c0_i32 = arith.constant 0 : i32
    %c0_i32_0 = arith.constant 0 : i32
    %c0_i32_1 = arith.constant 0 : i32
    return %c0_i32, %c0_i32_0 : i32, i32
  }
  func.func @transform_3(%arg0: i32, %arg1: i32) -> (i32, i32) {
    %c0_i32 = arith.constant 0 : i32
    %c0_i32_0 = arith.constant 0 : i32
    %c0_i32_1 = arith.constant 0 : i32
    return %c0_i32, %c0_i32_0 : i32, i32
  }
  func.func @transform_4(%arg0: i32, %arg1: i32) -> (i32, i32) {
    %c0_i32 = arith.constant 0 : i32
    %c0_i32_0 = arith.constant 0 : i32
    %c0_i32_1 = arith.constant 0 : i32
    return %c0_i32, %c0_i32_0 : i32, i32
  }
}

</mosaic_0001>

<llo_original>
// kernel: tile.18
$region0: #{tile.18}
  #allocation0 [shape = 's32[1]{0}', space=sflag, size = 0x4, scoped, tag = 'scoped memory for tile.18']
  %s0 = inlined_call_operand.vmem [shape: f32[8], index: 0, kind: input, shape index: {}]
  %s1 = inlined_call_operand.vmem [shape: f32[16,8], index: 1, kind: output, shape index: {}]
  // Predicated region
  $region2: #{tile.18} parent=0 // pred_check
    _
  $region3: #{tile.18} parent=0 // pred_check_branch
    %3 = sbr.rel (0) target = $region5
  $region4: #{tile.18} parent=0 // pred_region
    _
  $region5: #{tile.18} parent=0 // pred_fallthru
    _
  %v4 = vld [vmem:[%s0] ss:$0 sm:$0xff]
  %5 = vst [vmem:[%s1] sm:$0xff] %v4
  %s6 = scalar_lea.vmem %s1, 8
  %7 = vst [vmem:[%s6] sm:$0xff] %v4

// kernel: _lambda_.3
$region0: #{_lambda_.3}
  #allocation0 [shape = 'u32[]', space=smem, size = 0x4, offset = 0x4, fixed_abs, tag = 'smem constant byte address 0x4 - core index']
  #allocation1 [shape = 'u32[144,128]{1,0:T(1,128)}', space=vmem, size = 0x12000, scoped, tag = 'internal scratch']
  %s0 = inlined_call_operand.vmem [shape: f32[2,18,72], index: 0, kind: input, shape index: {}]
  %s1 = inlined_call_operand.vmem [shape: f32[3,72,128], index: 1, kind: input, shape index: {}]
  %s2 = inlined_call_operand.vmem [shape: f32[8,128], index: 2, kind: input, shape index: {}]
  %s3 = inlined_call_operand.vmem [shape: f32[8,128], index: 3, kind: input, shape index: {}]
  %s4 = inlined_call_operand.vmem [shape: f32[2,16,128], index: 4, kind: output, shape index: {}]
  %s5 = sld [smem:[#allocation0]]
  $region49: #{_lambda_.3} parent=0
    _
  %s7 = ssub.s32 1, %s5
  %s8 = scalar_select 0, %s7, %s5
  loop: start=0, step=1, limit=4
  $region2: #{_lambda_.3} parent=0 // loop_pre_header
    _
  $region3: #{_lambda_.3} parent=0 // loop_header
    %s10 = sphi 0, %s14
    %p11 = scmp.ge.s32.totalorder %s10, 4
    %s17 = sphi 0, %s29
    %s18 = sphi 0, %s25
    %s19 = sphi 0, %s17
    %s20 = sphi 0, %s18
    %s21 = sphi 0, %s19
    %s22 = sphi 0, %s20
    %s32 = sphi 0, %s34
    %s35 = sphi 0, %s32
    %s36 = sphi 0, %s35
    %s52 = sphi 0, %s36
    %s56 = sphi 0, %s56
    %s58 = sphi 0, %s56
    %s59 = sphi 0, %s58
    %s73 = sphi 0, %s59
    %s77 = sphi 0, %s77
    %s79 = sphi 0, %s77
    %s80 = sphi 0, %s79
    %s94 = sphi 0, %s80
    %s98 = sphi 0, %s98
    %s100 = sphi 0, %s98
    %s101 = sphi 0, %s100
    %s115 = sphi 0, %s101
    %s123 = sphi 0, %s125
    %s126 = sphi 0, %s123
    %s127 = sphi 0, %s126
    %s143 = sphi 0, %s127
  $region4: #{_lambda_.3} parent=0 // loop_header_branch
    %13 = sbr.rel (%p11) target = $region8
  $region5: #{_lambda_.3} parent=0 // loop_body
    %s15 = ssub.s32 %s10, 1
    %s16 = ssub.s32 %s10, 2
    %s23 = sadd.s32 1, %s18
    %p24 = scmp.ge.s32.totalorder %s23, 1
    %s25 = scalar_select %p24, 0, %s23
    %s26 = sadd.s32 1, %s17
    %s27 = scalar_select %p24, %s26, %s17
    %p28 = scmp.ge.s32.totalorder %s27, 2
    %s29 = scalar_select %p28, 0, %s27
    %s30 = ssub.s32 %s17, %s29
    %p31 = scmp.eq.s32.totalorder %s30, 0
    %s33 = sadd.s32 %s32, 1
    %s34 = scalar_select %p31, %s32, %s33
    %p37 = pneg %p31
    %p38 = scmp.eq.s32.totalorder %s10, 1
    %p39 = por %p37, %p38
    %p40 = scmp.ne.s32.totalorder %s32, %s35
    %p41 = scmp.eq.s32.totalorder %s10, 0
    %p42 = por %p40, %p41
    %p43 = scmp.ne.s32.totalorder %s32, %s35
    %p44 = scmp.eq.s32.totalorder %s15, 1
    %p45 = por %p43, %p44
    %p46 = scmp.ne.s32.totalorder %s35, %s36
    %p47 = scmp.eq.s32.totalorder %s15, 0
    %p48 = por %p46, %p47
    %p49 = scmp.ne.s32.totalorder %s35, %s36
    %p50 = scmp.eq.s32.totalorder %s16, 1
    %p51 = por %p49, %p50
    %p53 = scmp.ne.s32.totalorder %s36, %s52
    %p54 = scmp.eq.s32.totalorder %s16, 0
    %p55 = por %p53, %p54
    %s57 = sadd.s32 %s56, 1
    %p60 = scmp.eq.s32.totalorder %s10, 1
    %p61 = scmp.ne.s32.totalorder %s56, %s58
    %p62 = scmp.eq.s32.totalorder %s10, 0
    %p63 = por %p61, %p62
    %p64 = scmp.ne.s32.totalorder %s56, %s58
    %p65 = scmp.eq.s32.totalorder %s15, 1
    %p66 = por %p64, %p65
    %p67 = scmp.ne.s32.totalorder %s58, %s59
    %p68 = scmp.eq.s32.totalorder %s15, 0
    %p69 = por %p67, %p68
    %p70 = scmp.ne.s32.totalorder %s58, %s59
    %p71 = scmp.eq.s32.totalorder %s16, 1
    %p72 = por %p70, %p71
    %p74 = scmp.ne.s32.totalorder %s59, %s73
    %p75 = scmp.eq.s32.totalorder %s16, 0
    %p76 = por %p74, %p75
    %s78 = sadd.s32 %s77, 1
    %p81 = scmp.eq.s32.totalorder %s10, 1
    %p82 = scmp.ne.s32.totalorder %s77, %s79
    %p83 = scmp.eq.s32.totalorder %s10, 0
    %p84 = por %p82, %p83
    %p85 = scmp.ne.s32.totalorder %s77, %s79
    %p86 = scmp.eq.s32.totalorder %s15, 1
    %p87 = por %p85, %p86
    %p88 = scmp.ne.s32.totalorder %s79, %s80
    %p89 = scmp.eq.s32.totalorder %s15, 0
    %p90 = por %p88, %p89
    %p91 = scmp.ne.s32.totalorder %s79, %s80
    %p92 = scmp.eq.s32.totalorder %s16, 1
    %p93 = por %p91, %p92
    %p95 = scmp.ne.s32.totalorder %s80, %s94
    %p96 = scmp.eq.s32.totalorder %s16, 0
    %p97 = por %p95, %p96
    %s99 = sadd.s32 %s98, 1
    %p102 = scmp.eq.s32.totalorder %s10, 1
    %p103 = scmp.ne.s32.totalorder %s98, %s100
    %p104 = scmp.eq.s32.totalorder %s10, 0
    %p105 = por %p103, %p104
    %p106 = scmp.ne.s32.totalorder %s98, %s100
    %p107 = scmp.eq.s32.totalorder %s15, 1
    %p108 = por %p106, %p107
    %p109 = scmp.ne.s32.totalorder %s100, %s101
    %p110 = scmp.eq.s32.totalorder %s15, 0
    %p111 = por %p109, %p110
    %p112 = scmp.ne.s32.totalorder %s100, %s101
    %p113 = scmp.eq.s32.totalorder %s16, 1
    %p114 = por %p112, %p113
    %p116 = scmp.ne.s32.totalorder %s101, %s115
    %p117 = scmp.eq.s32.totalorder %s16, 0
    %p118 = por %p116, %p117
    %s119 = ssub.s32 %s17, %s29
    %s120 = ssub.s32 %s18, %s25
    %s121 = sor.u32 %s119, %s120
    %p122 = scmp.eq.s32.totalorder %s121, 0
    %s124 = sadd.s32 %s123, 1
    %s125 = scalar_select %p122, %s123, %s124
    %p128 = pneg %p122
    %p129 = scmp.eq.s32.totalorder %s10, 1
    %p130 = por %p128, %p129
    %p131 = scmp.ne.s32.totalorder %s123, %s126
    %p132 = scmp.eq.s32.totalorder %s10, 0
    %p133 = por %p131, %p132
    %p134 = scmp.ne.s32.totalorder %s123, %s126
    %p135 = scmp.eq.s32.totalorder %s15, 1
    %p136 = por %p134, %p135
    %p137 = scmp.ne.s32.totalorder %s126, %s127
    %p138 = scmp.eq.s32.totalorder %s15, 0
    %p139 = por %p137, %p138
    %p140 = scmp.ne.s32.totalorder %s126, %s127
    %p141 = scmp.eq.s32.totalorder %s16, 1
    %p142 = por %p140, %p141
    %p144 = scmp.ne.s32.totalorder %s127, %s143
    %p145 = scmp.eq.s32.totalorder %s16, 0
    %p146 = por %p144, %p145
    %p147 = scmp.le.s32.totalorder 1, %s10
    %p148 = scmp.lt.s32.totalorder %s10, 3
    %p149 = pnand %p147, %p148
    %p150 = pneg %p149
    // Predicated region
    $region9: #{_lambda_.3} parent=5 // pred_check
      _
    $region10: #{_lambda_.3} parent=5 // pred_check_branch
      %152 = sbr.rel (%p149) target = $region12
    $region11: #{_lambda_.3} parent=5 // pred_region
      %s153 = ssub.s32 %s10, 1
      // Predicated region
      $region13: #{_lambda_.3} parent=11 // pred_check
        %p154 = pneg %p69
      $region14: #{_lambda_.3} parent=11 // pred_check_branch
        %156 = sbr.rel (%p154) target = $region16
      $region15: #{_lambda_.3} parent=11 // pred_region
        _
      $region16: #{_lambda_.3} parent=11 // pred_fallthru
        _
      // Predicated region
      $region17: #{_lambda_.3} parent=11 // pred_check
        %p157 = pneg %p90
      $region18: #{_lambda_.3} parent=11 // pred_check_branch
        %159 = sbr.rel (%p157) target = $region20
      $region19: #{_lambda_.3} parent=11 // pred_region
        _
      $region20: #{_lambda_.3} parent=11 // pred_fallthru
        _
      // Predicated region
      $region21: #{_lambda_.3} parent=11 // pred_check
        %p160 = pneg %p111
      $region22: #{_lambda_.3} parent=11 // pred_check_branch
        %162 = sbr.rel (%p160) target = $region24
      $region23: #{_lambda_.3} parent=11 // pred_region
        _
      $region24: #{_lambda_.3} parent=11 // pred_fallthru
        _
    $region12: #{_lambda_.3} parent=5 // pred_fallthru
      _
    %p163 = scmp.lt.s32.totalorder %s10, 2
    // Predicated region
    $region25: #{_lambda_.3} parent=5 // pred_check
      %p164 = pneg %p163
    $region26: #{_lambda_.3} parent=5 // pred_check_branch
      %166 = sbr.rel (%p164) target = $region28
    $region27: #{_lambda_.3} parent=5 // pred_region
      // Predicated region
      $region29: #{_lambda_.3} parent=27 // pred_check
        %p167 = pneg %p42
      $region30: #{_lambda_.3} parent=27 // pred_check_branch
        %169 = sbr.rel (%p167) target = $region32
      $region31: #{_lambda_.3} parent=27 // pred_region
        %p170 = scmp.lt.s32.totalorder %s17, 1
        %s171 = scalar_select %p170, %s17, 1
        %s172 = smul.addr %s171, 3
        %s173 = smul.addr %s172, 8
        %s174 = scalar_lea.vmem %s0, %s173
      $region32: #{_lambda_.3} parent=27 // pred_fallthru
        _
    $region28: #{_lambda_.3} parent=5 // pred_fallthru
      _
    %p175 = scmp.le.s32.totalorder 1, %s10
    %p176 = scmp.lt.s32.totalorder %s10, 3
    %p177 = pnand %p175, %p176
    %p178 = pneg %p177
    // Predicated region
    $region33: #{_lambda_.3} parent=5 // pred_check
      _
    $region34: #{_lambda_.3} parent=5 // pred_check_branch
      %180 = sbr.rel (%p177) target = $region36
    $region35: #{_lambda_.3} parent=5 // pred_region
      %s181 = ssub.s32 %s10, 1
      %p182 = scmp.lt.s32.totalorder %s19, 1
      %s183 = scalar_select %p182, %s19, 1
      %s184 = smul.addr %s183, 3
      %s185 = smul.addr %s184, 8
      %s186 = scalar_lea.vmem %s0, %s185
      %p187 = pneg %p48
      %p188 = pneg %p45
      %p189 = pneg %p69
      %p190 = pneg %p66
      %p191 = pneg %p90
      %p192 = pneg %p87
      %p193 = pneg %p111
      %p194 = pneg %p108
      %p195 = pneg %p139
      %p196 = pneg %p136
      %s197 = smul.u32 2, %s20
      %p198 = scmp.lt.s32.totalorder %s19, 1
      %s199 = scalar_select %p198, %s19, 1
      %p200 = scmp.lt.s32.totalorder %s197, 1
      %s201 = scalar_select %p200, %s197, 1
      %s202 = smul.addr %s199, 2
      %s203 = sadd.s32 %s201, %s202
      %s204 = smul.addr %s203, 8
      %s205 = scalar_lea.vmem %s4, %s204
      %p206 = scmp.lt.s32.totalorder %s19, 1
      %s207 = scalar_select %p206, %s19, 1
      %s208 = smul.addr %s207, 3
      %s209 = smul.addr %s208, 8
      %s210 = scalar_lea.vmem %s0, %s209
      %s211 = smul.u32 2, %s20
      %p212 = scmp.lt.s32.totalorder %s19, 1
      %s213 = scalar_select %p212, %s19, 1
      %p214 = scmp.lt.s32.totalorder %s211, 1
      %s215 = scalar_select %p214, %s211, 1
      %s216 = smul.addr %s213, 2
      %s217 = sadd.s32 %s215, %s216
      %s218 = smul.addr %s217, 8
      %s219 = scalar_lea.vmem %s4, %s218
      %s220 = smul.u32 2, %s20
      %s221 = smul.u32 %s20, 16
      %s222 = scalar_lea.vmem %s210, %s221
      %v223 = vld [vmem:[%s222] sm:$0xff]
      %v224 = vld [vmem:[%s222 + $0x8] sm:$0xff]
      %v225 = vld [vmem:[%s1] sm:$0xff]
      %v226 = vld [vmem:[%s1 + $0x8] sm:$0xff]
      %v227 = vld [vmem:[%s1 + $0x10] sm:$0xff]
      %v228 = vld [vmem:[%s1 + $0x18] sm:$0xff]
      %v229 = vld [vmem:[%s1 + $0x20] sm:$0xff]
      %v230 = vld [vmem:[%s1 + $0x28] sm:$0xff]
      %v231 = vld [vmem:[%s1 + $0x30] sm:$0xff]
      %v232 = vld [vmem:[%s1 + $0x38] sm:$0xff]
      %v233 = vld [vmem:[%s1 + $0x40] sm:$0xff]
      %s234 = sadd.s32 %s221, 1
      %s235 = scalar_lea.vmem %s210, %s234
      %v236 = vld [vmem:[%s235] sm:$0xff]
      %v237 = vld [vmem:[%s235 + $0x8] sm:$0xff]
      %s238 = scalar_lea.vmem %s1, 72
      %v239 = vld [vmem:[%s238] sm:$0xff]
      %v240 = vld [vmem:[%s238 + $0x8] sm:$0xff]
      %v241 = vld [vmem:[%s238 + $0x10] sm:$0xff]
      %v242 = vld [vmem:[%s238 + $0x18] sm:$0xff]
      %v243 = vld [vmem:[%s238 + $0x20] sm:$0xff]
      %v244 = vld [vmem:[%s238 + $0x28] sm:$0xff]
      %v245 = vld [vmem:[%s238 + $0x30] sm:$0xff]
      %v246 = vld [vmem:[%s238 + $0x38] sm:$0xff]
      %v247 = vld [vmem:[%s238 + $0x40] sm:$0xff]
      %vm248 = vcmask 588800
      %v250 = vsel %vm248, %v236, 0
      %v253 = vsel %vm248, %v237, 0
      %255 = vmatprep.subr.mxu0 0.0
      %256 = vmatpush1.msra.mxu0 %v239
      %257 = vmatprep.subr.mxu0 0.0
      %258 = vmatpush1.msra.mxu0 %v240
      %259 = vmatprep.subr.mxu0 0.0
      %260 = vmatpush1.msra.mxu0 %v241
      %261 = vmatprep.subr.mxu0 0.0
      %262 = vmatpush1.msra.mxu0 %v242
      %263 = vmatprep.subr.mxu0 0.0
      %264 = vmatpush1.msra.mxu0 %v243
      %265 = vmatprep.subr.mxu0 0.0
      %266 = vmatpush1.msra.mxu0 %v244
      %267 = vmatprep.subr.mxu0 0.0
      %268 = vmatpush1.msra.mxu0 %v245
      %269 = vmatprep.subr.mxu0 0.0
      %270 = vmatpush1.msra.mxu0 %v246
      %271 = vmatprep.subr.mxu0 0.0
      %272 = vmatpush1.msra.mxu0 %v247
      %273 = vmatprep.subr.mxu0 0.0
      %274 = vmatpush1.msra.mxu0 0.0
      %275 = vmatprep.subr.mxu0 0.0
      %276 = vmatpush1.msra.mxu0 0.0
      %277 = vmatprep.subr.mxu0 0.0
      %278 = vmatpush1.msra.mxu0 0.0
      %279 = vmatprep.subr.mxu0 0.0
      %280 = vmatpush1.msra.mxu0 0.0
      %281 = vmatprep.subr.mxu0 0.0
      %282 = vmatpush1.msra.mxu0 0.0
      %283 = vmatprep.subr.mxu0 0.0
      %284 = vmatpush1.msra.mxu0 0.0
      %285 = vmatprep.subr.mxu0 0.0
      %286 = vmatpush1.msra.mxu0 0.0
      %287 = vmatprep.subr.mxu0 0.0
      %288 = vmatpush1.msra.mxu0 0.0
      %289 = vmatprep.subr.mxu0 0.0
      %290 = vmatpush1.msra.mxu0 0.0
      %291 = vmatprep.subr.mxu0 0.0
      %292 = vmatpush1.msra.mxu0 0.0
      %293 = vmatprep.subr.mxu0 0.0
      %294 = vmatpush1.msra.mxu0 0.0
      %295 = vmatprep.subr.mxu0 0.0
      %296 = vmatpush1.msra.mxu0 0.0
      %297 = vmatprep.subr.mxu0 0.0
      %298 = vmatpush1.msra.mxu0 0.0
      %299 = vmatprep.subr.mxu0 0.0
      %300 = vmatpush1.msra.mxu0 0.0
      %301 = vmatprep.subr.mxu0 0.0
      %302 = vmatpush1.msra.mxu0 0.0
      %303 = vmatprep.subr.mxu0 0.0
      %304 = vmatpush1.msra.mxu0 0.0
      %305 = vmatprep.subr.mxu0 0.0
      %306 = vmatpush1.msra.mxu0 0.0
      %307 = vmatprep.subr.mxu0 0.0
      %308 = vmatpush1.msra.mxu0 0.0
      %309 = vmatprep.subr.mxu0 0.0
      %310 = vmatpush1.msra.mxu0 0.0
      %311 = vmatprep.subr.mxu0 0.0
      %312 = vmatpush1.msra.mxu0 0.0
      %313 = vmatprep.subr.mxu0 0.0
      %314 = vmatpush1.msra.mxu0 0.0
      %315 = vmatprep.subr.mxu0 0.0
      %316 = vmatpush1.msra.mxu0 0.0
      %317 = vmatprep.subr.mxu0 0.0
      %318 = vmatpush1.msra.mxu0 0.0
      %319 = vmatprep.mubr.f32.mxu0 0.0
      %320 = vmatmul.mubr.f32.gmra.mrb[0].mxu0 %v250
      %v321 = vpop.f32.mrb[0].mxu0
      %v322 = vadd.f32 0.0, %v321
      %v323 = vpop.f32.mrb[0].mxu0
      %324 = vmatprep.mubr.f32.mxu0 0.0
      %325 = vmatmul.mubr.f32.gmra.mrb[0].mxu0 %v253
      %v326 = vpop.f32.mrb[0].mxu0
      %v327 = vadd.f32 0.0, %v326
      %v328 = vpop.f32.mrb[0].mxu0
      %329 = vdwg.mxu0
      %v331 = vsel %vm248, %v223, 0
      %v334 = vsel %vm248, %v224, 0
      %336 = vmatprep.subr.mxu0 0.0
      %337 = vmatpush1.msra.mxu0 %v225
      %338 = vmatprep.subr.mxu0 0.0
      %339 = vmatpush1.msra.mxu0 %v226
      %340 = vmatprep.subr.mxu0 0.0
      %341 = vmatpush1.msra.mxu0 %v227
      %342 = vmatprep.subr.mxu0 0.0
      %343 = vmatpush1.msra.mxu0 %v228
      %344 = vmatprep.subr.mxu0 0.0
      %345 = vmatpush1.msra.mxu0 %v229
      %346 = vmatprep.subr.mxu0 0.0
      %347 = vmatpush1.msra.mxu0 %v230
      %348 = vmatprep.subr.mxu0 0.0
      %349 = vmatpush1.msra.mxu0 %v231
      %350 = vmatprep.subr.mxu0 0.0
      %351 = vmatpush1.msra.mxu0 %v232
      %352 = vmatprep.subr.mxu0 0.0
      %353 = vmatpush1.msra.mxu0 %v233
      %354 = vmatprep.subr.mxu0 0.0
      %355 = vmatpush1.msra.mxu0 0.0
      %356 = vmatprep.subr.mxu0 0.0
      %357 = vmatpush1.msra.mxu0 0.0
      %358 = vmatprep.subr.mxu0 0.0
      %359 = vmatpush1.msra.mxu0 0.0
      %360 = vmatprep.subr.mxu0 0.0
      %361 = vmatpush1.msra.mxu0 0.0
      %362 = vmatprep.subr.mxu0 0.0
      %363 = vmatpush1.msra.mxu0 0.0
      %364 = vmatprep.subr.mxu0 0.0
      %365 = vmatpush1.msra.mxu0 0.0
      %366 = vmatprep.subr.mxu0 0.0
      %367 = vmatpush1.msra.mxu0 0.0
      %368 = vmatprep.subr.mxu0 0.0
      %369 = vmatpush1.msra.mxu0 0.0
      %370 = vmatprep.subr.mxu0 0.0
      %371 = vmatpush1.msra.mxu0 0.0
      %372 = vmatprep.subr.mxu0 0.0
      %373 = vmatpush1.msra.mxu0 0.0
      %374 = vmatprep.subr.mxu0 0.0
      %375 = vmatpush1.msra.mxu0 0.0
      %376 = vmatprep.subr.mxu0 0.0
      %377 = vmatpush1.msra.mxu0 0.0
      %378 = vmatprep.subr.mxu0 0.0
      %379 = vmatpush1.msra.mxu0 0.0
      %380 = vmatprep.subr.mxu0 0.0
      %381 = vmatpush1.msra.mxu0 0.0
      %382 = vmatprep.subr.mxu0 0.0
      %383 = vmatpush1.msra.mxu0 0.0
      %384 = vmatprep.subr.mxu0 0.0
      %385 = vmatpush1.msra.mxu0 0.0
      %386 = vmatprep.subr.mxu0 0.0
      %387 = vmatpush1.msra.mxu0 0.0
      %388 = vmatprep.subr.mxu0 0.0
      %389 = vmatpush1.msra.mxu0 0.0
      %390 = vmatprep.subr.mxu0 0.0
      %391 = vmatpush1.msra.mxu0 0.0
      %392 = vmatprep.subr.mxu0 0.0
      %393 = vmatpush1.msra.mxu0 0.0
      %394 = vmatprep.subr.mxu0 0.0
      %395 = vmatpush1.msra.mxu0 0.0
      %396 = vmatprep.subr.mxu0 0.0
      %397 = vmatpush1.msra.mxu0 0.0
      %398 = vmatprep.subr.mxu0 0.0
      %399 = vmatpush1.msra.mxu0 0.0
      %400 = vmatprep.mubr.f32.mxu0 0.0
      %401 = vmatmul.mubr.f32.gmra.mrb[0].mxu0 %v331
      %v402 = vpop.f32.mrb[0].mxu0
      %v403 = vadd.f32 %v322, %v402
      %v404 = vpop.f32.mrb[0].mxu0
      %405 = vmatprep.mubr.f32.mxu0 0.0
      %406 = vmatmul.mubr.f32.gmra.mrb[0].mxu0 %v334
      %v407 = vpop.f32.mrb[0].mxu0
      %v408 = vadd.f32 %v327, %v407
      %v409 = vpop.f32.mrb[0].mxu0
      %410 = vdwg.mxu0
      %s411 = sadd.s32 %s221, 2
      %s412 = scalar_lea.vmem %s210, %s411
      %v413 = vld [vmem:[%s412] sm:$0xff]
      %v414 = vld [vmem:[%s412 + $0x8] sm:$0xff]
      %s415 = scalar_lea.vmem %s1, 144
      %v416 = vld [vmem:[%s415] sm:$0xff]
      %v417 = vld [vmem:[%s415 + $0x8] sm:$0xff]
      %v418 = vld [vmem:[%s415 + $0x10] sm:$0xff]
      %v419 = vld [vmem:[%s415 + $0x18] sm:$0xff]
      %v420 = vld [vmem:[%s415 + $0x20] sm:$0xff]
      %v421 = vld [vmem:[%s415 + $0x28] sm:$0xff]
      %v422 = vld [vmem:[%s415 + $0x30] sm:$0xff]
      %v423 = vld [vmem:[%s415 + $0x38] sm:$0xff]
      %v424 = vld [vmem:[%s415 + $0x40] sm:$0xff]
      %v426 = vsel %vm248, %v413, 0
      %v429 = vsel %vm248, %v414, 0
      %431 = vmatprep.subr.mxu0 0.0
      %432 = vmatpush1.msra.mxu0 %v416
      %433 = vmatprep.subr.mxu0 0.0
      %434 = vmatpush1.msra.mxu0 %v417
      %435 = vmatprep.subr.mxu0 0.0
      %436 = vmatpush1.msra.mxu0 %v418
      %437 = vmatprep.subr.mxu0 0.0
      %438 = vmatpush1.msra.mxu0 %v419
      %439 = vmatprep.subr.mxu0 0.0
      %440 = vmatpush1.msra.mxu0 %v420
      %441 = vmatprep.subr.mxu0 0.0
      %442 = vmatpush1.msra.mxu0 %v421
      %443 = vmatprep.subr.mxu0 0.0
      %444 = vmatpush1.msra.mxu0 %v422
      %445 = vmatprep.subr.mxu0 0.0
      %446 = vmatpush1.msra.mxu0 %v423
      %447 = vmatprep.subr.mxu0 0.0
      %448 = vmatpush1.msra.mxu0 %v424
      %449 = vmatprep.subr.mxu0 0.0
      %450 = vmatpush1.msra.mxu0 0.0
      %451 = vmatprep.subr.mxu0 0.0
      %452 = vmatpush1.msra.mxu0 0.0
      %453 = vmatprep.subr.mxu0 0.0
      %454 = vmatpush1.msra.mxu0 0.0
      %455 = vmatprep.subr.mxu0 0.0
      %456 = vmatpush1.msra.mxu0 0.0
      %457 = vmatprep.subr.mxu0 0.0
      %458 = vmatpush1.msra.mxu0 0.0
      %459 = vmatprep.subr.mxu0 0.0
      %460 = vmatpush1.msra.mxu0 0.0
      %461 = vmatprep.subr.mxu0 0.0
      %462 = vmatpush1.msra.mxu0 0.0
      %463 = vmatprep.subr.mxu0 0.0
      %464 = vmatpush1.msra.mxu0 0.0
      %465 = vmatprep.subr.mxu0 0.0
      %466 = vmatpush1.msra.mxu0 0.0
      %467 = vmatprep.subr.mxu0 0.0
      %468 = vmatpush1.msra.mxu0 0.0
      %469 = vmatprep.subr.mxu0 0.0
      %470 = vmatpush1.msra.mxu0 0.0
      %471 = vmatprep.subr.mxu0 0.0
      %472 = vmatpush1.msra.mxu0 0.0
      %473 = vmatprep.subr.mxu0 0.0
      %474 = vmatpush1.msra.mxu0 0.0
      %475 = vmatprep.subr.mxu0 0.0
      %476 = vmatpush1.msra.mxu0 0.0
      %477 = vmatprep.subr.mxu0 0.0
      %478 = vmatpush1.msra.mxu0 0.0
      %479 = vmatprep.subr.mxu0 0.0
      %480 = vmatpush1.msra.mxu0 0.0
      %481 = vmatprep.subr.mxu0 0.0
      %482 = vmatpush1.msra.mxu0 0.0
      %483 = vmatprep.subr.mxu0 0.0
      %484 = vmatpush1.msra.mxu0 0.0
      %485 = vmatprep.subr.mxu0 0.0
      %486 = vmatpush1.msra.mxu0 0.0
      %487 = vmatprep.subr.mxu0 0.0
      %488 = vmatpush1.msra.mxu0 0.0
      %489 = vmatprep.subr.mxu0 0.0
      %490 = vmatpush1.msra.mxu0 0.0
      %491 = vmatprep.subr.mxu0 0.0
      %492 = vmatpush1.msra.mxu0 0.0
      %493 = vmatprep.subr.mxu0 0.0
      %494 = vmatpush1.msra.mxu0 0.0
      %495 = vmatprep.mubr.f32.mxu0 0.0
      %496 = vmatmul.mubr.f32.gmra.mrb[0].mxu0 %v426
      %v497 = vpop.f32.mrb[0].mxu0
      %v498 = vadd.f32 0.0, %v497
      %v499 = vpop.f32.mrb[0].mxu0
      %500 = vmatprep.mubr.f32.mxu0 0.0
      %501 = vmatmul.mubr.f32.gmra.mrb[0].mxu0 %v429
      %v502 = vpop.f32.mrb[0].mxu0
      %v503 = vadd.f32 0.0, %v502
      %v504 = vpop.f32.mrb[0].mxu0
      %505 = vdwg.mxu0
      %v506 = vadd.f32 %v403, %v498
      %v507 = vadd.f32 %v408, %v503
      %v508 = vld [vmem:[%s2] sm:$0x1]
      %v509 = vlaneseq
      %v510 = vshrl.u32 %v509, 7
      %v511 = vsub.s32 0, %v510
      %v512 = vrot.slane %v508, %v511
      %v513 = vadd.f32 %v506, %v512
      %v514 = vadd.f32 %v507, %v512
      %v515 = vmax.f32 %v513, 0.0
      %v516 = vmax.f32 %v514, 0.0
      %v517 = vld [vmem:[%s3] sm:$0x1]
      %v518 = vld [vmem:[%s3 + $0x1] sm:$0x1]
      %v519 = vmul.f32 %v517, 0.001953125
      %v520 = vmul.f32 %v518, 0.001953125
      %v521 = vmul.f32 %v519, %v519
      %v522 = vsub.f32 %v520, %v521
      %v523 = vmax.f32 %v522, 0.0
      %v524 = vadd.f32 %v523, 1e-05
      %v525 = vrsqrt.pop %v524
      %v526 = vld [vmem:[%s2 + $0x1] sm:$0x1]
      %v527 = vmul.f32 %v526, %v525
      %v528 = vld [vmem:[%s2 + $0x2] sm:$0x1]
      %v529 = vmul.f32 %v519, %v527
      %v530 = vsub.f32 %v528, %v529
      %v531 = vlaneseq
      %v532 = vshrl.u32 %v531, 7
      %v533 = vsub.s32 0, %v532
      %v534 = vrot.slane %v527, %v533
      %v535 = vmul.f32 %v515, %v534
      %v536 = vmul.f32 %v516, %v534
      %v537 = vlaneseq
      %v538 = vshrl.u32 %v537, 7
      %v539 = vsub.s32 0, %v538
      %v540 = vrot.slane %v530, %v539
      %v541 = vadd.f32 %v535, %v540
      %v542 = vadd.f32 %v536, %v540
      %543 = vst [vmem:[%s219] sm:$0xff] %v541
      %544 = vst [vmem:[%s219 + $0x8] sm:$0xff] %v542
      %s545 = smul.u32 2, %s20
      %p546 = scmp.lt.s32.totalorder %s19, 1
      %s547 = scalar_select %p546, %s19, 1
      %p548 = scmp.lt.s32.totalorder %s545, 1
      %s549 = scalar_select %p548, %s545, 1
      %s550 = smul.addr %s547, 2
      %s551 = sadd.s32 %s549, %s550
      %s552 = smul.addr %s551, 8
      %s553 = scalar_lea.vmem %s4, %s552
      // Predicated region
      $region37: #{_lambda_.3} parent=35 // pred_check
        %p554 = pneg %p136
      $region38: #{_lambda_.3} parent=35 // pred_check_branch
        %556 = sbr.rel (%p554) target = $region40
      $region39: #{_lambda_.3} parent=35 // pred_region
        %s557 = smul.u32 2, %s20
      $region40: #{_lambda_.3} parent=35 // pred_fallthru
        _
    $region36: #{_lambda_.3} parent=5 // pred_fallthru
      _
    %p558 = scmp.le.s32.totalorder 2, %s10
    // Predicated region
    $region41: #{_lambda_.3} parent=5 // pred_check
      %p559 = pneg %p558
    $region42: #{_lambda_.3} parent=5 // pred_check_branch
      %561 = sbr.rel (%p559) target = $region44
    $region43: #{_lambda_.3} parent=5 // pred_region
      %s562 = ssub.s32 %s10, 2
      // Predicated region
      $region45: #{_lambda_.3} parent=43 // pred_check
        %p563 = pneg %p142
      $region46: #{_lambda_.3} parent=43 // pred_check_branch
        %565 = sbr.rel (%p563) target = $region48
      $region47: #{_lambda_.3} parent=43 // pred_region
        %s566 = smul.u32 2, %s22
        %p567 = scmp.lt.s32.totalorder %s21, 1
        %s568 = scalar_select %p567, %s21, 1
        %p569 = scmp.lt.s32.totalorder %s566, 1
        %s570 = scalar_select %p569, %s566, 1
        %s571 = smul.addr %s568, 2
        %s572 = sadd.s32 %s570, %s571
        %s573 = smul.addr %s572, 8
        %s574 = scalar_lea.vmem %s4, %s573
      $region48: #{_lambda_.3} parent=43 // pred_fallthru
        _
    $region44: #{_lambda_.3} parent=5 // pred_fallthru
      _
  $region6: #{_lambda_.3} parent=0 // loop_footer
    %s14 = sadd.s32 1, %s10
  $region7: #{_lambda_.3} parent=0 // loop_footer_branch
    %9 = sbr.rel target = $region3
  $region8: #{_lambda_.3} parent=0 // loop_exit
    _

// kernel: _lambda_.2
$region0: #{_lambda_.2}
  #allocation0 [shape = 'u32[]', space=smem, size = 0x4, offset = 0x4, fixed_abs, tag = 'smem constant byte address 0x4 - core index']
  #allocation1 [shape = 'u32[144,128]{1,0:T(1,128)}', space=vmem, size = 0x12000, scoped, tag = 'internal scratch']
  #allocation2 [shape = 'f32[8,128]{1,0:T(8,128)}', space=vmem, size = 0x1000, scoped, tag = 'scratch operand']
  %s0 = inlined_call_operand.vmem [shape: f32[2,18,72], index: 0, kind: input, shape index: {}]
  %s1 = inlined_call_operand.vmem [shape: f32[3,72,128], index: 1, kind: input, shape index: {}]
  %s2 = inlined_call_operand.vmem [shape: f32[8,128], index: 2, kind: input, shape index: {}]
  %s3 = inlined_call_operand.vmem [shape: f32[128,128], index: 3, kind: input, shape index: {}]
  %s4 = inlined_call_operand.vmem [shape: f32[8,128], index: 4, kind: output, shape index: {}]
  %s5 = sld [smem:[#allocation0]]
  $region57: #{_lambda_.2} parent=0
    _
  %s7 = ssub.s32 1, %s5
  %s8 = scalar_select 0, %s7, %s5
  loop: start=0, step=1, limit=4
  $region2: #{_lambda_.2} parent=0 // loop_pre_header
    _
  $region3: #{_lambda_.2} parent=0 // loop_header
    %s10 = sphi 0, %s14
    %p11 = scmp.ge.s32.totalorder %s10, 4
    %s17 = sphi 0, %s29
    %s18 = sphi 0, %s25
    %s19 = sphi 0, %s17
    %s20 = sphi 0, %s18
    %s21 = sphi 0, %s19
    %s22 = sphi 0, %s20
    %s32 = sphi 0, %s34
    %s35 = sphi 0, %s32
    %s36 = sphi 0, %s35
    %s52 = sphi 0, %s36
    %s56 = sphi 0, %s56
    %s58 = sphi 0, %s56
    %s59 = sphi 0, %s58
    %s73 = sphi 0, %s59
    %s77 = sphi 0, %s77
    %s79 = sphi 0, %s77
    %s80 = sphi 0, %s79
    %s94 = sphi 0, %s80
    %s98 = sphi 0, %s98
    %s100 = sphi 0, %s98
    %s101 = sphi 0, %s100
    %s115 = sphi 0, %s101
    %s119 = sphi 0, %s119
    %s121 = sphi 0, %s119
    %s122 = sphi 0, %s121
    %s136 = sphi 0, %s122
  $region4: #{_lambda_.2} parent=0 // loop_header_branch
    %13 = sbr.rel (%p11) target = $region8
  $region5: #{_lambda_.2} parent=0 // loop_body
    %s15 = ssub.s32 %s10, 1
    %s16 = ssub.s32 %s10, 2
    %s23 = sadd.s32 1, %s18
    %p24 = scmp.ge.s32.totalorder %s23, 1
    %s25 = scalar_select %p24, 0, %s23
    %s26 = sadd.s32 1, %s17
    %s27 = scalar_select %p24, %s26, %s17
    %p28 = scmp.ge.s32.totalorder %s27, 2
    %s29 = scalar_select %p28, 0, %s27
    %s30 = ssub.s32 %s17, %s29
    %p31 = scmp.eq.s32.totalorder %s30, 0
    %s33 = sadd.s32 %s32, 1
    %s34 = scalar_select %p31, %s32, %s33
    %p37 = pneg %p31
    %p38 = scmp.eq.s32.totalorder %s10, 1
    %p39 = por %p37, %p38
    %p40 = scmp.ne.s32.totalorder %s32, %s35
    %p41 = scmp.eq.s32.totalorder %s10, 0
    %p42 = por %p40, %p41
    %p43 = scmp.ne.s32.totalorder %s32, %s35
    %p44 = scmp.eq.s32.totalorder %s15, 1
    %p45 = por %p43, %p44
    %p46 = scmp.ne.s32.totalorder %s35, %s36
    %p47 = scmp.eq.s32.totalorder %s15, 0
    %p48 = por %p46, %p47
    %p49 = scmp.ne.s32.totalorder %s35, %s36
    %p50 = scmp.eq.s32.totalorder %s16, 1
    %p51 = por %p49, %p50
    %p53 = scmp.ne.s32.totalorder %s36, %s52
    %p54 = scmp.eq.s32.totalorder %s16, 0
    %p55 = por %p53, %p54
    %s57 = sadd.s32 %s56, 1
    %p60 = scmp.eq.s32.totalorder %s10, 1
    %p61 = scmp.ne.s32.totalorder %s56, %s58
    %p62 = scmp.eq.s32.totalorder %s10, 0
    %p63 = por %p61, %p62
    %p64 = scmp.ne.s32.totalorder %s56, %s58
    %p65 = scmp.eq.s32.totalorder %s15, 1
    %p66 = por %p64, %p65
    %p67 = scmp.ne.s32.totalorder %s58, %s59
    %p68 = scmp.eq.s32.totalorder %s15, 0
    %p69 = por %p67, %p68
    %p70 = scmp.ne.s32.totalorder %s58, %s59
    %p71 = scmp.eq.s32.totalorder %s16, 1
    %p72 = por %p70, %p71
    %p74 = scmp.ne.s32.totalorder %s59, %s73
    %p75 = scmp.eq.s32.totalorder %s16, 0
    %p76 = por %p74, %p75
    %s78 = sadd.s32 %s77, 1
    %p81 = scmp.eq.s32.totalorder %s10, 1
    %p82 = scmp.ne.s32.totalorder %s77, %s79
    %p83 = scmp.eq.s32.totalorder %s10, 0
    %p84 = por %p82, %p83
    %p85 = scmp.ne.s32.totalorder %s77, %s79
    %p86 = scmp.eq.s32.totalorder %s15, 1
    %p87 = por %p85, %p86
    %p88 = scmp.ne.s32.totalorder %s79, %s80
    %p89 = scmp.eq.s32.totalorder %s15, 0
    %p90 = por %p88, %p89
    %p91 = scmp.ne.s32.totalorder %s79, %s80
    %p92 = scmp.eq.s32.totalorder %s16, 1
    %p93 = por %p91, %p92
    %p95 = scmp.ne.s32.totalorder %s80, %s94
    %p96 = scmp.eq.s32.totalorder %s16, 0
    %p97 = por %p95, %p96
    %s99 = sadd.s32 %s98, 1
    %p102 = scmp.eq.s32.totalorder %s10, 1
    %p103 = scmp.ne.s32.totalorder %s98, %s100
    %p104 = scmp.eq.s32.totalorder %s10, 0
    %p105 = por %p103, %p104
    %p106 = scmp.ne.s32.totalorder %s98, %s100
    %p107 = scmp.eq.s32.totalorder %s15, 1
    %p108 = por %p106, %p107
    %p109 = scmp.ne.s32.totalorder %s100, %s101
    %p110 = scmp.eq.s32.totalorder %s15, 0
    %p111 = por %p109, %p110
    %p112 = scmp.ne.s32.totalorder %s100, %s101
    %p113 = scmp.eq.s32.totalorder %s16, 1
    %p114 = por %p112, %p113
    %p116 = scmp.ne.s32.totalorder %s101, %s115
    %p117 = scmp.eq.s32.totalorder %s16, 0
    %p118 = por %p116, %p117
    %s120 = sadd.s32 %s119, 1
    %p123 = scmp.eq.s32.totalorder %s10, 1
    %p124 = scmp.ne.s32.totalorder %s119, %s121
    %p125 = scmp.eq.s32.totalorder %s10, 0
    %p126 = por %p124, %p125
    %p127 = scmp.ne.s32.totalorder %s119, %s121
    %p128 = scmp.eq.s32.totalorder %s15, 1
    %p129 = por %p127, %p128
    %p130 = scmp.ne.s32.totalorder %s121, %s122
    %p131 = scmp.eq.s32.totalorder %s15, 0
    %p132 = por %p130, %p131
    %p133 = scmp.ne.s32.totalorder %s121, %s122
    %p134 = scmp.eq.s32.totalorder %s16, 1
    %p135 = por %p133, %p134
    %p137 = scmp.ne.s32.totalorder %s122, %s136
    %p138 = scmp.eq.s32.totalorder %s16, 0
    %p139 = por %p137, %p138
    %p140 = scmp.le.s32.totalorder 1, %s10
    %p141 = scmp.lt.s32.totalorder %s10, 3
    %p142 = pnand %p140, %p141
    %p143 = pneg %p142
    // Predicated region
    $region9: #{_lambda_.2} parent=5 // pred_check
      _
    $region10: #{_lambda_.2} parent=5 // pred_check_branch
      %145 = sbr.rel (%p142) target = $region12
    $region11: #{_lambda_.2} parent=5 // pred_region
      %s146 = ssub.s32 %s10, 1
      // Predicated region
      $region13: #{_lambda_.2} parent=11 // pred_check
        %p147 = pneg %p69
      $region14: #{_lambda_.2} parent=11 // pred_check_branch
        %149 = sbr.rel (%p147) target = $region16
      $region15: #{_lambda_.2} parent=11 // pred_region
        _
      $region16: #{_lambda_.2} parent=11 // pred_fallthru
        _
      // Predicated region
      $region17: #{_lambda_.2} parent=11 // pred_check
        %p150 = pneg %p90
      $region18: #{_lambda_.2} parent=11 // pred_check_branch
        %152 = sbr.rel (%p150) target = $region20
      $region19: #{_lambda_.2} parent=11 // pred_region
        _
      $region20: #{_lambda_.2} parent=11 // pred_fallthru
        _
      // Predicated region
      $region21: #{_lambda_.2} parent=11 // pred_check
        %p153 = pneg %p111
      $region22: #{_lambda_.2} parent=11 // pred_check_branch
        %155 = sbr.rel (%p153) target = $region24
      $region23: #{_lambda_.2} parent=11 // pred_region
        _
      $region24: #{_lambda_.2} parent=11 // pred_fallthru
        _
    $region12: #{_lambda_.2} parent=5 // pred_fallthru
      _
    %p156 = scmp.lt.s32.totalorder %s10, 2
    // Predicated region
    $region25: #{_lambda_.2} parent=5 // pred_check
      %p157 = pneg %p156
    $region26: #{_lambda_.2} parent=5 // pred_check_branch
      %159 = sbr.rel (%p157) target = $region28
    $region27: #{_lambda_.2} parent=5 // pred_region
      // Predicated region
      $region29: #{_lambda_.2} parent=27 // pred_check
        %p160 = pneg %p42
      $region30: #{_lambda_.2} parent=27 // pred_check_branch
        %162 = sbr.rel (%p160) target = $region32
      $region31: #{_lambda_.2} parent=27 // pred_region
        %p163 = scmp.lt.s32.totalorder %s17, 1
        %s164 = scalar_select %p163, %s17, 1
        %s165 = smul.addr %s164, 3
        %s166 = smul.addr %s165, 8
        %s167 = scalar_lea.vmem %s0, %s166
      $region32: #{_lambda_.2} parent=27 // pred_fallthru
        _
    $region28: #{_lambda_.2} parent=5 // pred_fallthru
      _
    %p168 = scmp.le.s32.totalorder 1, %s10
    %p169 = scmp.lt.s32.totalorder %s10, 3
    %p170 = pnand %p168, %p169
    %p171 = pneg %p170
    // Predicated region
    $region33: #{_lambda_.2} parent=5 // pred_check
      _
    $region34: #{_lambda_.2} parent=5 // pred_check_branch
      %173 = sbr.rel (%p170) target = $region36
    $region35: #{_lambda_.2} parent=5 // pred_region
      %s174 = ssub.s32 %s10, 1
      %p175 = scmp.lt.s32.totalorder %s19, 1
      %s176 = scalar_select %p175, %s19, 1
      %s177 = smul.addr %s176, 3
      %s178 = smul.addr %s177, 8
      %s179 = scalar_lea.vmem %s0, %s178
      %p180 = pneg %p48
      %p181 = pneg %p45
      %p182 = pneg %p69
      %p183 = pneg %p66
      %p184 = pneg %p90
      %p185 = pneg %p87
      %p186 = pneg %p111
      %p187 = pneg %p108
      %p188 = pneg %p132
      %p189 = pneg %p129
      %p190 = scmp.lt.s32.totalorder %s19, 1
      %s191 = scalar_select %p190, %s19, 1
      %s192 = smul.addr %s191, 3
      %s193 = smul.addr %s192, 8
      %s194 = scalar_lea.vmem %s0, %s193
      %p195 = scmp.eq.s32.totalorder %s19, 0
      %p196 = scmp.eq.s32.totalorder %s20, 0
      %p197 = pnand %p195, %p196
      %p198 = pneg %p197
      // Predicated region
      $region37: #{_lambda_.2} parent=35 // pred_check
        _
      $region38: #{_lambda_.2} parent=35 // pred_check_branch
        %200 = sbr.rel (%p197) target = $region40
      $region39: #{_lambda_.2} parent=35 // pred_region
        %201 = vst [vmem:[#allocation2] sm:$0xff] 0.0
      $region40: #{_lambda_.2} parent=35 // pred_fallthru
        _
      %s202 = smul.u32 %s20, 16
      %s203 = scalar_lea.vmem %s194, %s202
      %v204 = vld [vmem:[%s203] sm:$0xff]
      %v205 = vld [vmem:[%s203 + $0x8] sm:$0xff]
      %v206 = vld [vmem:[%s1] sm:$0xff]
      %v207 = vld [vmem:[%s1 + $0x8] sm:$0xff]
      %v208 = vld [vmem:[%s1 + $0x10] sm:$0xff]
      %v209 = vld [vmem:[%s1 + $0x18] sm:$0xff]
      %v210 = vld [vmem:[%s1 + $0x20] sm:$0xff]
      %v211 = vld [vmem:[%s1 + $0x28] sm:$0xff]
      %v212 = vld [vmem:[%s1 + $0x30] sm:$0xff]
      %v213 = vld [vmem:[%s1 + $0x38] sm:$0xff]
      %v214 = vld [vmem:[%s1 + $0x40] sm:$0xff]
      %s215 = sadd.s32 %s202, 1
      %s216 = scalar_lea.vmem %s194, %s215
      %v217 = vld [vmem:[%s216] sm:$0xff]
      %v218 = vld [vmem:[%s216 + $0x8] sm:$0xff]
      %s219 = scalar_lea.vmem %s1, 72
      %v220 = vld [vmem:[%s219] sm:$0xff]
      %v221 = vld [vmem:[%s219 + $0x8] sm:$0xff]
      %v222 = vld [vmem:[%s219 + $0x10] sm:$0xff]
      %v223 = vld [vmem:[%s219 + $0x18] sm:$0xff]
      %v224 = vld [vmem:[%s219 + $0x20] sm:$0xff]
      %v225 = vld [vmem:[%s219 + $0x28] sm:$0xff]
      %v226 = vld [vmem:[%s219 + $0x30] sm:$0xff]
      %v227 = vld [vmem:[%s219 + $0x38] sm:$0xff]
      %v228 = vld [vmem:[%s219 + $0x40] sm:$0xff]
      %vm229 = vcmask 588800
      %v231 = vsel %vm229, %v217, 0
      %v234 = vsel %vm229, %v218, 0
      %236 = vmatprep.subr.mxu0 0.0
      %237 = vmatpush1.msra.mxu0 %v220
      %238 = vmatprep.subr.mxu0 0.0
      %239 = vmatpush1.msra.mxu0 %v221
      %240 = vmatprep.subr.mxu0 0.0
      %241 = vmatpush1.msra.mxu0 %v222
      %242 = vmatprep.subr.mxu0 0.0
      %243 = vmatpush1.msra.mxu0 %v223
      %244 = vmatprep.subr.mxu0 0.0
      %245 = vmatpush1.msra.mxu0 %v224
      %246 = vmatprep.subr.mxu0 0.0
      %247 = vmatpush1.msra.mxu0 %v225
      %248 = vmatprep.subr.mxu0 0.0
      %249 = vmatpush1.msra.mxu0 %v226
      %250 = vmatprep.subr.mxu0 0.0
      %251 = vmatpush1.msra.mxu0 %v227
      %252 = vmatprep.subr.mxu0 0.0
      %253 = vmatpush1.msra.mxu0 %v228
      %254 = vmatprep.subr.mxu0 0.0
      %255 = vmatpush1.msra.mxu0 0.0
      %256 = vmatprep.subr.mxu0 0.0
      %257 = vmatpush1.msra.mxu0 0.0
      %258 = vmatprep.subr.mxu0 0.0
      %259 = vmatpush1.msra.mxu0 0.0
      %260 = vmatprep.subr.mxu0 0.0
      %261 = vmatpush1.msra.mxu0 0.0
      %262 = vmatprep.subr.mxu0 0.0
      %263 = vmatpush1.msra.mxu0 0.0
      %264 = vmatprep.subr.mxu0 0.0
      %265 = vmatpush1.msra.mxu0 0.0
      %266 = vmatprep.subr.mxu0 0.0
      %267 = vmatpush1.msra.mxu0 0.0
      %268 = vmatprep.subr.mxu0 0.0
      %269 = vmatpush1.msra.mxu0 0.0
      %270 = vmatprep.subr.mxu0 0.0
      %271 = vmatpush1.msra.mxu0 0.0
      %272 = vmatprep.subr.mxu0 0.0
      %273 = vmatpush1.msra.mxu0 0.0
      %274 = vmatprep.subr.mxu0 0.0
      %275 = vmatpush1.msra.mxu0 0.0
      %276 = vmatprep.subr.mxu0 0.0
      %277 = vmatpush1.msra.mxu0 0.0
      %278 = vmatprep.subr.mxu0 0.0
      %279 = vmatpush1.msra.mxu0 0.0
      %280 = vmatprep.subr.mxu0 0.0
      %281 = vmatpush1.msra.mxu0 0.0
      %282 = vmatprep.subr.mxu0 0.0
      %283 = vmatpush1.msra.mxu0 0.0
      %284 = vmatprep.subr.mxu0 0.0
      %285 = vmatpush1.msra.mxu0 0.0
      %286 = vmatprep.subr.mxu0 0.0
      %287 = vmatpush1.msra.mxu0 0.0
      %288 = vmatprep.subr.mxu0 0.0
      %289 = vmatpush1.msra.mxu0 0.0
      %290 = vmatprep.subr.mxu0 0.0
      %291 = vmatpush1.msra.mxu0 0.0
      %292 = vmatprep.subr.mxu0 0.0
      %293 = vmatpush1.msra.mxu0 0.0
      %294 = vmatprep.subr.mxu0 0.0
      %295 = vmatpush1.msra.mxu0 0.0
      %296 = vmatprep.subr.mxu0 0.0
      %297 = vmatpush1.msra.mxu0 0.0
      %298 = vmatprep.subr.mxu0 0.0
      %299 = vmatpush1.msra.mxu0 0.0
      %300 = vmatprep.mubr.f32.mxu0 0.0
      %301 = vmatmul.mubr.f32.gmra.mrb[0].mxu0 %v231
      %v302 = vpop.f32.mrb[0].mxu0
      %v303 = vadd.f32 0.0, %v302
      %v304 = vpop.f32.mrb[0].mxu0
      %305 = vmatprep.mubr.f32.mxu0 0.0
      %306 = vmatmul.mubr.f32.gmra.mrb[0].mxu0 %v234
      %v307 = vpop.f32.mrb[0].mxu0
      %v308 = vadd.f32 0.0, %v307
      %v309 = vpop.f32.mrb[0].mxu0
      %310 = vdwg.mxu0
      %v312 = vsel %vm229, %v204, 0
      %v315 = vsel %vm229, %v205, 0
      %317 = vmatprep.subr.mxu0 0.0
      %318 = vmatpush1.msra.mxu0 %v206
      %319 = vmatprep.subr.mxu0 0.0
      %320 = vmatpush1.msra.mxu0 %v207
      %321 = vmatprep.subr.mxu0 0.0
      %322 = vmatpush1.msra.mxu0 %v208
      %323 = vmatprep.subr.mxu0 0.0
      %324 = vmatpush1.msra.mxu0 %v209
      %325 = vmatprep.subr.mxu0 0.0
      %326 = vmatpush1.msra.mxu0 %v210
      %327 = vmatprep.subr.mxu0 0.0
      %328 = vmatpush1.msra.mxu0 %v211
      %329 = vmatprep.subr.mxu0 0.0
      %330 = vmatpush1.msra.mxu0 %v212
      %331 = vmatprep.subr.mxu0 0.0
      %332 = vmatpush1.msra.mxu0 %v213
      %333 = vmatprep.subr.mxu0 0.0
      %334 = vmatpush1.msra.mxu0 %v214
      %335 = vmatprep.subr.mxu0 0.0
      %336 = vmatpush1.msra.mxu0 0.0
      %337 = vmatprep.subr.mxu0 0.0
      %338 = vmatpush1.msra.mxu0 0.0
      %339 = vmatprep.subr.mxu0 0.0
      %340 = vmatpush1.msra.mxu0 0.0
      %341 = vmatprep.subr.mxu0 0.0
      %342 = vmatpush1.msra.mxu0 0.0
      %343 = vmatprep.subr.mxu0 0.0
      %344 = vmatpush1.msra.mxu0 0.0
      %345 = vmatprep.subr.mxu0 0.0
      %346 = vmatpush1.msra.mxu0 0.0
      %347 = vmatprep.subr.mxu0 0.0
      %348 = vmatpush1.msra.mxu0 0.0
      %349 = vmatprep.subr.mxu0 0.0
      %350 = vmatpush1.msra.mxu0 0.0
      %351 = vmatprep.subr.mxu0 0.0
      %352 = vmatpush1.msra.mxu0 0.0
      %353 = vmatprep.subr.mxu0 0.0
      %354 = vmatpush1.msra.mxu0 0.0
      %355 = vmatprep.subr.mxu0 0.0
      %356 = vmatpush1.msra.mxu0 0.0
      %357 = vmatprep.subr.mxu0 0.0
      %358 = vmatpush1.msra.mxu0 0.0
      %359 = vmatprep.subr.mxu0 0.0
      %360 = vmatpush1.msra.mxu0 0.0
      %361 = vmatprep.subr.mxu0 0.0
      %362 = vmatpush1.msra.mxu0 0.0
      %363 = vmatprep.subr.mxu0 0.0
      %364 = vmatpush1.msra.mxu0 0.0
      %365 = vmatprep.subr.mxu0 0.0
      %366 = vmatpush1.msra.mxu0 0.0
      %367 = vmatprep.subr.mxu0 0.0
      %368 = vmatpush1.msra.mxu0 0.0
      %369 = vmatprep.subr.mxu0 0.0
      %370 = vmatpush1.msra.mxu0 0.0
      %371 = vmatprep.subr.mxu0 0.0
      %372 = vmatpush1.msra.mxu0 0.0
      %373 = vmatprep.subr.mxu0 0.0
      %374 = vmatpush1.msra.mxu0 0.0
      %375 = vmatprep.subr.mxu0 0.0
      %376 = vmatpush1.msra.mxu0 0.0
      %377 = vmatprep.subr.mxu0 0.0
      %378 = vmatpush1.msra.mxu0 0.0
      %379 = vmatprep.subr.mxu0 0.0
      %380 = vmatpush1.msra.mxu0 0.0
      %381 = vmatprep.mubr.f32.mxu0 0.0
      %382 = vmatmul.mubr.f32.gmra.mrb[0].mxu0 %v312
      %v383 = vpop.f32.mrb[0].mxu0
      %v384 = vadd.f32 %v303, %v383
      %v385 = vpop.f32.mrb[0].mxu0
      %386 = vmatprep.mubr.f32.mxu0 0.0
      %387 = vmatmul.mubr.f32.gmra.mrb[0].mxu0 %v315
      %v388 = vpop.f32.mrb[0].mxu0
      %v389 = vadd.f32 %v308, %v388
      %v390 = vpop.f32.mrb[0].mxu0
      %391 = vdwg.mxu0
      %s392 = sadd.s32 %s202, 2
      %s393 = scalar_lea.vmem %s194, %s392
      %v394 = vld [vmem:[%s393] sm:$0xff]
      %v395 = vld [vmem:[%s393 + $0x8] sm:$0xff]
      %s396 = scalar_lea.vmem %s1, 144
      %v397 = vld [vmem:[%s396] sm:$0xff]
      %v398 = vld [vmem:[%s396 + $0x8] sm:$0xff]
      %v399 = vld [vmem:[%s396 + $0x10] sm:$0xff]
      %v400 = vld [vmem:[%s396 + $0x18] sm:$0xff]
      %v401 = vld [vmem:[%s396 + $0x20] sm:$0xff]
      %v402 = vld [vmem:[%s396 + $0x28] sm:$0xff]
      %v403 = vld [vmem:[%s396 + $0x30] sm:$0xff]
      %v404 = vld [vmem:[%s396 + $0x38] sm:$0xff]
      %v405 = vld [vmem:[%s396 + $0x40] sm:$0xff]
      %v407 = vsel %vm229, %v394, 0
      %v410 = vsel %vm229, %v395, 0
      %412 = vmatprep.subr.mxu0 0.0
      %413 = vmatpush1.msra.mxu0 %v397
      %414 = vmatprep.subr.mxu0 0.0
      %415 = vmatpush1.msra.mxu0 %v398
      %416 = vmatprep.subr.mxu0 0.0
      %417 = vmatpush1.msra.mxu0 %v399
      %418 = vmatprep.subr.mxu0 0.0
      %419 = vmatpush1.msra.mxu0 %v400
      %420 = vmatprep.subr.mxu0 0.0
      %421 = vmatpush1.msra.mxu0 %v401
      %422 = vmatprep.subr.mxu0 0.0
      %423 = vmatpush1.msra.mxu0 %v402
      %424 = vmatprep.subr.mxu0 0.0
      %425 = vmatpush1.msra.mxu0 %v403
      %426 = vmatprep.subr.mxu0 0.0
      %427 = vmatpush1.msra.mxu0 %v404
      %428 = vmatprep.subr.mxu0 0.0
      %429 = vmatpush1.msra.mxu0 %v405
      %430 = vmatprep.subr.mxu0 0.0
      %431 = vmatpush1.msra.mxu0 0.0
      %432 = vmatprep.subr.mxu0 0.0
      %433 = vmatpush1.msra.mxu0 0.0
      %434 = vmatprep.subr.mxu0 0.0
      %435 = vmatpush1.msra.mxu0 0.0
      %436 = vmatprep.subr.mxu0 0.0
      %437 = vmatpush1.msra.mxu0 0.0
      %438 = vmatprep.subr.mxu0 0.0
      %439 = vmatpush1.msra.mxu0 0.0
      %440 = vmatprep.subr.mxu0 0.0
      %441 = vmatpush1.msra.mxu0 0.0
      %442 = vmatprep.subr.mxu0 0.0
      %443 = vmatpush1.msra.mxu0 0.0
      %444 = vmatprep.subr.mxu0 0.0
      %445 = vmatpush1.msra.mxu0 0.0
      %446 = vmatprep.subr.mxu0 0.0
      %447 = vmatpush1.msra.mxu0 0.0
      %448 = vmatprep.subr.mxu0 0.0
      %449 = vmatpush1.msra.mxu0 0.0
      %450 = vmatprep.subr.mxu0 0.0
      %451 = vmatpush1.msra.mxu0 0.0
      %452 = vmatprep.subr.mxu0 0.0
      %453 = vmatpush1.msra.mxu0 0.0
      %454 = vmatprep.subr.mxu0 0.0
      %455 = vmatpush1.msra.mxu0 0.0
      %456 = vmatprep.subr.mxu0 0.0
      %457 = vmatpush1.msra.mxu0 0.0
      %458 = vmatprep.subr.mxu0 0.0
      %459 = vmatpush1.msra.mxu0 0.0
      %460 = vmatprep.subr.mxu0 0.0
      %461 = vmatpush1.msra.mxu0 0.0
      %462 = vmatprep.subr.mxu0 0.0
      %463 = vmatpush1.msra.mxu0 0.0
      %464 = vmatprep.subr.mxu0 0.0
      %465 = vmatpush1.msra.mxu0 0.0
      %466 = vmatprep.subr.mxu0 0.0
      %467 = vmatpush1.msra.mxu0 0.0
      %468 = vmatprep.subr.mxu0 0.0
      %469 = vmatpush1.msra.mxu0 0.0
      %470 = vmatprep.subr.mxu0 0.0
      %471 = vmatpush1.msra.mxu0 0.0
      %472 = vmatprep.subr.mxu0 0.0
      %473 = vmatpush1.msra.mxu0 0.0
      %474 = vmatprep.subr.mxu0 0.0
      %475 = vmatpush1.msra.mxu0 0.0
      %476 = vmatprep.mubr.f32.mxu0 0.0
      %477 = vmatmul.mubr.f32.gmra.mrb[0].mxu0 %v407
      %v478 = vpop.f32.mrb[0].mxu0
      %v479 = vadd.f32 0.0, %v478
      %v480 = vpop.f32.mrb[0].mxu0
      %481 = vmatprep.mubr.f32.mxu0 0.0
      %482 = vmatmul.mubr.f32.gmra.mrb[0].mxu0 %v410
      %v483 = vpop.f32.mrb[0].mxu0
      %v484 = vadd.f32 0.0, %v483
      %v485 = vpop.f32.mrb[0].mxu0
      %486 = vdwg.mxu0
      %v487 = vadd.f32 %v384, %v479
      %v488 = vadd.f32 %v389, %v484
      %v489 = vld [vmem:[%s2] sm:$0x1]
      %v490 = vlaneseq
      %v491 = vshrl.u32 %v490, 7
      %v492 = vsub.s32 0, %v491
      %v493 = vrot.slane %v489, %v492
      %v494 = vadd.f32 %v487, %v493
      %v495 = vadd.f32 %v488, %v493
      %v496 = vmax.f32 %v494, 0.0
      %v497 = vmax.f32 %v495, 0.0
      %v498 = vld [vmem:[#allocation2] sm:$0x1]
      %v499 = vadd.f32 %v496, %v497
      %v500 = vrot.slane %v499, 4
      %v501 = vadd.f32 %v499, %v500
      %v502 = vrot.slane %v501, 2
      %v503 = vadd.f32 %v501, %v502
      %v504 = vrot.slane %v503, 1
      %v505 = vadd.f32 %v503, %v504
      %v506 = vadd.f32 %v498, %v505
      %507 = vst [vmem:[#allocation2] sm:$0x1] %v506
      %v508 = vld [vmem:[#allocation2 + $0x1] sm:$0x1]
      %v509 = vmul.f32 %v496, %v496
      %v510 = vmul.f32 %v497, %v497
      %v511 = vadd.f32 %v509, %v510
      %v512 = vrot.slane %v511, 4
      %v513 = vadd.f32 %v511, %v512
      %v514 = vrot.slane %v513, 2
      %v515 = vadd.f32 %v513, %v514
      %v516 = vrot.slane %v515, 1
      %v517 = vadd.f32 %v515, %v516
      %v518 = vadd.f32 %v508, %v517
      %519 = vst [vmem:[#allocation2 + $0x1] sm:$0x1] %v518
      %p520 = scmp.eq.s32.totalorder %s19, 1
      %p521 = pnand %p520, %p196
      %p522 = pneg %p521
      // Predicated region
      $region41: #{_lambda_.2} parent=35 // pred_check
        _
      $region42: #{_lambda_.2} parent=35 // pred_check_branch
        %524 = sbr.rel (%p521) target = $region44
      $region43: #{_lambda_.2} parent=35 // pred_region
        %v525 = vld [vmem:[#allocation2] sm:$0xff]
        %v526 = vld [vmem:[%s3] sm:$0xff]
        %v527 = vld [vmem:[%s3 + $0x8] sm:$0xff]
        %v528 = vld [vmem:[%s3 + $0x10] sm:$0xff]
        %v529 = vld [vmem:[%s3 + $0x18] sm:$0xff]
        %v530 = vld [vmem:[%s3 + $0x20] sm:$0xff]
        %v531 = vld [vmem:[%s3 + $0x28] sm:$0xff]
        %v532 = vld [vmem:[%s3 + $0x30] sm:$0xff]
        %v533 = vld [vmem:[%s3 + $0x38] sm:$0xff]
        %v534 = vld [vmem:[%s3 + $0x40] sm:$0xff]
        %v535 = vld [vmem:[%s3 + $0x48] sm:$0xff]
        %v536 = vld [vmem:[%s3 + $0x50] sm:$0xff]
        %v537 = vld [vmem:[%s3 + $0x58] sm:$0xff]
        %v538 = vld [vmem:[%s3 + $0x60] sm:$0xff]
        %v539 = vld [vmem:[%s3 + $0x68] sm:$0xff]
        %v540 = vld [vmem:[%s3 + $0x70] sm:$0xff]
        %v541 = vld [vmem:[%s3 + $0x78] sm:$0xff]
        %542 = vmatprep.subr.mxu0 0.0
        %543 = vmatpush1.msra.mxu0 %v526
        %544 = vmatprep.subr.mxu0 0.0
        %545 = vmatpush1.msra.mxu0 %v527
        %546 = vmatprep.subr.mxu0 0.0
        %547 = vmatpush1.msra.mxu0 %v528
        %548 = vmatprep.subr.mxu0 0.0
        %549 = vmatpush1.msra.mxu0 %v529
        %550 = vmatprep.subr.mxu0 0.0
        %551 = vmatpush1.msra.mxu0 %v530
        %552 = vmatprep.subr.mxu0 0.0
        %553 = vmatpush1.msra.mxu0 %v531
        %554 = vmatprep.subr.mxu0 0.0
        %555 = vmatpush1.msra.mxu0 %v532
        %556 = vmatprep.subr.mxu0 0.0
        %557 = vmatpush1.msra.mxu0 %v533
        %558 = vmatprep.subr.mxu0 0.0
        %559 = vmatpush1.msra.mxu0 %v534
        %560 = vmatprep.subr.mxu0 0.0
        %561 = vmatpush1.msra.mxu0 %v535
        %562 = vmatprep.subr.mxu0 0.0
        %563 = vmatpush1.msra.mxu0 %v536
        %564 = vmatprep.subr.mxu0 0.0
        %565 = vmatpush1.msra.mxu0 %v537
        %566 = vmatprep.subr.mxu0 0.0
        %567 = vmatpush1.msra.mxu0 %v538
        %568 = vmatprep.subr.mxu0 0.0
        %569 = vmatpush1.msra.mxu0 %v539
        %570 = vmatprep.subr.mxu0 0.0
        %571 = vmatpush1.msra.mxu0 %v540
        %572 = vmatprep.subr.mxu0 0.0
        %573 = vmatpush1.msra.mxu0 %v541
        %574 = vmatprep.subr.mxu0 0.0
        %575 = vmatpush1.msra.mxu0 0.0
        %576 = vmatprep.subr.mxu0 0.0
        %577 = vmatpush1.msra.mxu0 0.0
        %578 = vmatprep.subr.mxu0 0.0
        %579 = vmatpush1.msra.mxu0 0.0
        %580 = vmatprep.subr.mxu0 0.0
        %581 = vmatpush1.msra.mxu0 0.0
        %582 = vmatprep.subr.mxu0 0.0
        %583 = vmatpush1.msra.mxu0 0.0
        %584 = vmatprep.subr.mxu0 0.0
        %585 = vmatpush1.msra.mxu0 0.0
        %586 = vmatprep.subr.mxu0 0.0
        %587 = vmatpush1.msra.mxu0 0.0
        %588 = vmatprep.subr.mxu0 0.0
        %589 = vmatpush1.msra.mxu0 0.0
        %590 = vmatprep.subr.mxu0 0.0
        %591 = vmatpush1.msra.mxu0 0.0
        %592 = vmatprep.subr.mxu0 0.0
        %593 = vmatpush1.msra.mxu0 0.0
        %594 = vmatprep.subr.mxu0 0.0
        %595 = vmatpush1.msra.mxu0 0.0
        %596 = vmatprep.subr.mxu0 0.0
        %597 = vmatpush1.msra.mxu0 0.0
        %598 = vmatprep.subr.mxu0 0.0
        %599 = vmatpush1.msra.mxu0 0.0
        %600 = vmatprep.subr.mxu0 0.0
        %601 = vmatpush1.msra.mxu0 0.0
        %602 = vmatprep.subr.mxu0 0.0
        %603 = vmatpush1.msra.mxu0 0.0
        %604 = vmatprep.subr.mxu0 0.0
        %605 = vmatpush1.msra.mxu0 0.0
        %606 = vmatprep.mubr.f32.mxu0 0.0
        %607 = vmatmul.mubr.f32.gmra.mrb[0].mxu0 %v525
        %v608 = vpop.f32.mrb[0].mxu0
        %v609 = vadd.f32 0.0, %v608
        %v610 = vpop.f32.mrb[0].mxu0
        %611 = vdwg.mxu0
        %612 = vst [vmem:[%s4] sm:$0xff] %v609
      $region44: #{_lambda_.2} parent=35 // pred_fallthru
        _
      // Predicated region
      $region45: #{_lambda_.2} parent=35 // pred_check
        %p613 = pneg %p129
      $region46: #{_lambda_.2} parent=35 // pred_check_branch
        %615 = sbr.rel (%p613) target = $region48
      $region47: #{_lambda_.2} parent=35 // pred_region
        _
      $region48: #{_lambda_.2} parent=35 // pred_fallthru
        _
      // Predicated region
      $region49: #{_lambda_.2} parent=35 // pred_check
        %p616 = pneg %p129
      $region50: #{_lambda_.2} parent=35 // pred_check_branch
        %618 = sbr.rel (%p616) target = $region52
      $region51: #{_lambda_.2} parent=35 // pred_region
        _
      $region52: #{_lambda_.2} parent=35 // pred_fallthru
        _
    $region36: #{_lambda_.2} parent=5 // pred_fallthru
      _
    %p619 = scmp.le.s32.totalorder 2, %s10
    // Predicated region
    $region53: #{_lambda_.2} parent=5 // pred_check
      %p620 = pneg %p619
    $region54: #{_lambda_.2} parent=5 // pred_check_branch
      %622 = sbr.rel (%p620) target = $region56
    $region55: #{_lambda_.2} parent=5 // pred_region
      %s623 = ssub.s32 %s10, 2
    $region56: #{_lambda_.2} parent=5 // pred_fallthru
      _
  $region6: #{_lambda_.2} parent=0 // loop_footer
    %s14 = sadd.s32 1, %s10
  $region7: #{_lambda_.2} parent=0 // loop_footer_branch
    %9 = sbr.rel target = $region3
  $region8: #{_lambda_.2} parent=0 // loop_exit
    _

</llo_original>
